<compile_context>
chip_gen: v7x
topology: tpu7x:2x2x1
jax: 0.10.0
libtpu: 0.0.40
codegen_flags: <defaults>
</compile_context>

<pallas_src>
import functools

import numpy as np
import jax
import jax.numpy as jnp
from jax import lax
from jax.experimental import pallas as pl
from jax.experimental.pallas import tpu as pltpu


# -------------------- fused Pallas kernel --------------------

def _fused_kernel(xfull_ref, xpad_ref, rmp_ref, ct_ref, vt_ref, wcomb_ref,
                  bias_ref, out_ref, *, an, h, w, s):
    """One grid cell = (batch n, angular row u).

    Produces output rows [u*h*s, (u+1)*h*s) of the upscaled image, stored as a
    lane-dense (h, s*Ws) block of the (b, Hin, s*Ws) output (free reshape to
    (b, Hs, Ws) in the wrapper).
    """
    Win = an * w
    s2 = s * s
    u = pl.program_id(1)

    xf = xfull_ref[0]                                   # (Hin, Win), for bilinear

    # ---- per-view 3x3 conv taps, folded with the 1x1 upsample head ----
    # local row / column index inside a sub-aperture view (for boundary masks)
    rows = lax.broadcasted_iota(jnp.int32, (h, Win), 0)           # 0..h-1
    colm = lax.broadcasted_iota(jnp.int32, (h, Win), 1) % w       # 0..w-1

    row0 = u * h + 1                                    # +1: halo offset in padded copy
    acc = [jnp.zeros((h, Win), jnp.float32) for _ in range(s2)]
    k = 0
    for dy in (-1, 0, 1):
        for dx in (-1, 0, 1):
            # tap[r, c] = x[u*h + r + dy, c + dx]  (read from the 1-px padded copy)
            t = xpad_ref[0, pl.ds(row0 + dy, h), pl.ds(1 + dx, Win)]
            # zero taps that cross a sub-aperture-view boundary (this also
            # reproduces the conv's zero padding at the image edge)
            m = None
            if dy == -1:
                m = rows >= 1
            elif dy == 1:
                m = rows <= h - 2
            if dx == -1:
                m = (colm >= 1) if m is None else (m & (colm >= 1))
            elif dx == 1:
                m = (colm <= w - 2) if m is None else (m & (colm <= w - 2))
            if m is not None:
                t = jnp.where(m, t, 0.0)
            for q in range(s2):
                acc[q] = acc[q] + t * wcomb_ref[k, q]             # (1,1) broadcast
            k += 1

    # ---- PixelShuffle + bilinear residual assembly (lane-dense output) ----
    planes = []
    for i in range(s):
        # bilinear residual rows for sub-row-position i:  (Rm_i @ x) @ C^T
        bi = jnp.dot(rmp_ref[0, i], xf, preferred_element_type=jnp.float32)   # (h, Win)
        pi = jnp.dot(bi, ct_ref[...], preferred_element_type=jnp.float32)     # (h, Ws)
        # column interleave of the head outputs via 0/1 placement matmuls (MXU)
        for j in range(s):
            pi = pi + jnp.dot(acc[i * s + j], vt_ref[j],
                              preferred_element_type=jnp.float32)
        pi = pi + bias_ref[i]                                                 # (1, Ws)
        planes.append(pi)
    out_ref[0] = jnp.concatenate(planes, axis=1)                              # (h, s*Ws)


# -------------------- wrapper --------------------

def _bilinear_matrix_np(in_size, scale):
    """Matches torch F.interpolate(mode='bilinear', align_corners=False)."""
    out_size = in_size * scale
    M = np.zeros((out_size, in_size), dtype=np.float32)
    for i in range(out_size):
        src = max((i + 0.5) / scale - 0.5, 0.0)
        i0 = min(int(np.floor(src)), in_size - 1)
        i1 = min(i0 + 1, in_size - 1)
        lam = src - i0
        M[i, i0] += 1.0 - lam
        M[i, i1] += lam
    return M


def dsmnet_forward(lf_lr, params, *, an, scale):
    b, _, Hin, Win = lf_lr.shape
    assert Hin % an == 0 and Win % an == 0, "spatial dims must be multiples of angRes"
    assert isinstance(scale, int) and scale >= 1
    h, w = Hin // an, Win // an
    s = scale
    s2 = s * s
    Hs, Ws = Hin * s, Win * s
    nf = params["enc_w"].shape[1]
    assert h % 8 == 0, "per-view height must be a multiple of 8 (sublane tile)"

    # ---- fold the upsample head: Conv1x1(nf->nf*s^2) + PixelShuffle + Conv1x1(nf->1)
    w1r = params["up_w1"].reshape(nf, nf, s2)                   # [k_feat, c, q]
    w2 = params["up_w2"][:, 0]                                  # (nf,)
    w_eff = jnp.einsum("kcq,c->kq", w1r, w2)                    # (nf, s2)
    b_eff = (params["up_b1"].reshape(nf, s2) * params["up_w2"]).sum(0)   # (s2,)
    # ---- fold encoder conv with the head (matching groups are identity - see TODO)
    w_comb = (params["enc_w"] @ w_eff).reshape(9, s2, 1, 1)     # (9, s2, 1, 1)
    bias_p = jnp.tile(b_eff.reshape(s, 1, s), (1, 1, Win))      # (s, 1, Ws)

    # ---- trace-time constants for the fused bilinear residual + PixelShuffle ----
    rm = _bilinear_matrix_np(Hin, s)                            # (Hs, Hin)
    cm = _bilinear_matrix_np(Win, s)                            # (Ws, Win)
    rm_p = jnp.asarray(rm.reshape(an, h, s, Hin).transpose(0, 2, 1, 3))   # (an, s, h, Hin)
    ct = jnp.asarray(cm.T)                                      # (Win, Ws)
    vt_np = np.zeros((s, Win, Ws), np.float32)                  # 0/1 column placement
    for j in range(s):
        vt_np[j, np.arange(Win), np.arange(Win) * s + j] = 1.0
    vt = jnp.asarray(vt_np)

    x2d = lf_lr[:, 0]                                           # (b, Hin, Win)
    xpad = jnp.pad(x2d, ((0, 0), (1, 1), (1, 1)))               # 1-px halo for the taps

    out3 = pl.pallas_call(
        functools.partial(_fused_kernel, an=an, h=h, w=w, s=s),
        out_shape=jax.ShapeDtypeStruct((b, Hin, s * Ws), jnp.float32),
        grid=(b, an),
        in_specs=[
            pl.BlockSpec((1, Hin, Win), lambda n, u: (n, 0, 0)),            # x (bilinear)
            pl.BlockSpec((1, Hin + 2, Win + 2), lambda n, u: (n, 0, 0)),    # x padded (taps)
            pl.BlockSpec((1, s, h, Hin), lambda n, u: (u, 0, 0, 0)),        # Rm rows
            pl.BlockSpec((Win, Ws), lambda n, u: (0, 0)),                   # C^T
            pl.BlockSpec((s, Win, Ws), lambda n, u: (0, 0, 0)),             # placement
            pl.BlockSpec((9, s2, 1, 1), lambda n, u: (0, 0, 0, 0)),         # W_comb
            pl.BlockSpec((s, 1, Ws), lambda n, u: (0, 0, 0)),               # bias pattern
        ],
        out_specs=pl.BlockSpec((1, h, s * Ws), lambda n, u: (n, u, 0)),
        compiler_params=pltpu.CompilerParams(
            dimension_semantics=("parallel", "parallel")),
    )(x2d, xpad, rm_p, ct, vt, w_comb, bias_p)

    # (b, Hin, s*Ws) -> (b, 1, Hs, Ws) is a free row-major reshape (row interleave)
    return out3.reshape(b, 1, Hs, Ws)


# -------------------- pure-JAX reference (unfused, for validation) --------------------

def _forward_reference(lf_lr, params, an, scale, nf):
    b, _, Hin, Win = lf_lr.shape
    h, w = Hin // an, Win // an
    Rm = jnp.asarray(_bilinear_matrix_np(Hin, scale))
    Cm = jnp.asarray(_bilinear_matrix_np(Win, scale))
    bil = jnp.einsum("oh,bhw,pw->bop", Rm, lf_lr[:, 0], Cm)
    x = (lf_lr[:, 0].reshape(b, an, h, an, w).transpose(0, 2, 1, 4, 3)
         .reshape(b, 1, h * an, w * an))
    Wc = params["enc_w"].T.reshape(nf, 1, 3, 3)
    conv = jax.lax.conv_general_dilated(
        x, Wc, window_strides=(1, 1), padding=[(an, an), (an, an)],
        rhs_dilation=(an, an), dimension_numbers=("NCHW", "OIHW", "NCHW"))
    feat_mp = conv.transpose(0, 2, 3, 1)
    feat = (feat_mp.reshape(b, h, an, w, an, nf).transpose(0, 2, 1, 4, 3, 5)
            .reshape(b, an * h, an * w, nf))
    y1 = feat @ params["up_w1"] + params["up_b1"][0]
    Rr, Q = an * h, an * w
    y1 = (y1.reshape(b, Rr, Q, nf, scale, scale).transpose(0, 1, 4, 2, 5, 3)
          .reshape(b, Rr * scale, Q * scale, nf))
    y2 = (y1 @ params["up_w2"])[..., 0] + bil
    return y2[:, None]


# -------------------- main --------------------

if __name__ == "__main__":
    AN, SCALE, NF = 2, 2, 16          # angRes_in, scale_factor, nf
    B, H, W = 2, 8, 8                 # batch, per-view spatial

    key = jax.random.PRNGKey(0)
    kx, k0, k1, k2, k3 = jax.random.split(key, 5)
    lf_lr = jax.random.normal(kx, (B, 1, AN * H, AN * W), dtype=jnp.float32)

    params = {
        # init_conv weight (nf,1,3,3) stored as (9, nf): [ky*3+kx, oc]
        "enc_w": 0.1 * jax.random.normal(k0, (9, NF), dtype=jnp.float32),
        # upsample[0]: Conv2d(nf, nf*scale^2, 1) weight as (nf, nf*scale^2) + bias
        "up_w1": 0.1 * jax.random.normal(k1, (NF, NF * SCALE * SCALE), dtype=jnp.float32),
        "up_b1": 0.1 * jax.random.normal(k2, (1, NF * SCALE * SCALE), dtype=jnp.float32),
        # upsample[2]: Conv2d(nf, 1, 1, bias=False) weight as (nf, 1)
        "up_w2": 0.1 * jax.random.normal(k3, (NF, 1), dtype=jnp.float32),
    }

    fwd = jax.jit(functools.partial(dsmnet_forward, an=AN, scale=SCALE))
    out = jax.block_until_ready(fwd(lf_lr, params))
    assert out.shape == (B, 1, AN * H * SCALE, AN * W * SCALE), out.shape

    ref = jax.block_until_ready(_forward_reference(lf_lr, params, AN, SCALE, NF))
    np.testing.assert_allclose(np.asarray(out), np.asarray(ref),
                               atol=2e-3, rtol=2e-3)
    print("KERNEL_OK")
</pallas_src>

<mosaic_0001>
module attributes {stable_mosaic.version = 11 : i64} {
  func.func @_fused_kernel(%arg0: i32, %arg1: i32, %arg2: memref<1x16x16xf32, #tpu.memory_space<vmem>>, %arg3: memref<1x18x18xf32, #tpu.memory_space<vmem>>, %arg4: memref<1x2x8x16xf32, #tpu.memory_space<vmem>>, %arg5: memref<16x32xf32, #tpu.memory_space<vmem>>, %arg6: memref<2x16x32xf32, #tpu.memory_space<vmem>>, %arg7: memref<9x4x1x1xf32, #tpu.memory_space<vmem>>, %arg8: memref<2x1x32xf32, #tpu.memory_space<vmem>>, %arg9: memref<1x8x64xf32, #tpu.memory_space<vmem>>) attributes {dimension_semantics = [#tpu.dimension_semantics<parallel>, #tpu.dimension_semantics<parallel>], iteration_bounds = array<i64: 2, 2>, scalar_prefetch = 0 : i64, scratch_operands = 0 : i64, tpu.core_type = #tpu.core_type<tc>, window_params = [{transform_indices = @transform_0, window_bounds = array<i64: 1, 16, 16>}, {transform_indices = @transform_1, window_bounds = array<i64: 1, 18, 18>}, {transform_indices = @transform_2, window_bounds = array<i64: 1, 2, 8, 16>}, {pipeline_mode = #tpu.pipeline_mode<synchronous>, transform_indices = @transform_3, window_bounds = array<i64: 16, 32>}, {pipeline_mode = #tpu.pipeline_mode<synchronous>, transform_indices = @transform_4, window_bounds = array<i64: 2, 16, 32>}, {pipeline_mode = #tpu.pipeline_mode<synchronous>, transform_indices = @transform_5, window_bounds = array<i64: 9, 4, 1, 1>}, {pipeline_mode = #tpu.pipeline_mode<synchronous>, transform_indices = @transform_6, window_bounds = array<i64: 2, 1, 32>}, {transform_indices = @transform_7, window_bounds = array<i64: 1, 8, 64>}]} {
    %c0 = arith.constant 0 : index
    %c0_0 = arith.constant 0 : index
    %c0_1 = arith.constant 0 : index
    %0 = vector.load %arg2[%c0, %c0_0, %c0_1] : memref<1x16x16xf32, #tpu.memory_space<vmem>>, vector<1x16x16xf32>
    %1 = vector.shape_cast %0 : vector<1x16x16xf32> to vector<16x16xf32>
    %2 = tpu.iota {dimensions = array<i32: 0>} : vector<8x16xi32>
    %3 = tpu.iota {dimensions = array<i32: 1>} : vector<8x16xi32>
    %c8_i32 = arith.constant 8 : i32
    %c0_i32 = arith.constant 0 : i32
    %4 = arith.cmpi eq, %c8_i32, %c0_i32 : i32
    %c1_i32 = arith.constant 1 : i32
    %5 = arith.select %4, %c1_i32, %c8_i32 : i32
    %6 = vector.broadcast %5 : i32 to vector<8x16xi32>
    %7 = arith.remsi %3, %6 : vector<8x16xi32>
    %c0_i32_2 = arith.constant 0 : i32
    %8 = vector.broadcast %c0_i32_2 : i32 to vector<8x16xi32>
    %9 = arith.cmpi ne, %7, %8 : vector<8x16xi32>
    %c0_i32_3 = arith.constant 0 : i32
    %10 = vector.broadcast %c0_i32_3 : i32 to vector<8x16xi32>
    %11 = arith.cmpi slt, %7, %10 : vector<8x16xi32>
    %c0_i32_4 = arith.constant 0 : i32
    %12 = arith.cmpi slt, %5, %c0_i32_4 : i32
    %13 = vector.broadcast %12 : i1 to vector<8x16xi1>
    %14 = vector.broadcast %13 : vector<8x16xi1> to vector<8x16xi1>
    %15 = arith.xori %11, %14 : vector<8x16xi1>
    %16 = arith.andi %15, %9 : vector<8x16xi1>
    %17 = vector.broadcast %5 : i32 to vector<8x16xi32>
    %18 = arith.addi %7, %17 : vector<8x16xi32>
    %19 = arith.select %16, %18, %7 : vector<8x16xi1>, vector<8x16xi32>
    %c8_i32_5 = arith.constant 8 : i32
    %20 = arith.muli %arg1, %c8_i32_5 : i32
    %c1_i32_6 = arith.constant 1 : i32
    %21 = arith.addi %20, %c1_i32_6 : i32
    %cst = arith.constant 0.000000e+00 : f32
    %22 = vector.broadcast %cst : f32 to vector<8x16xf32>
    %cst_7 = arith.constant 0.000000e+00 : f32
    %23 = vector.broadcast %cst_7 : f32 to vector<8x16xf32>
    %cst_8 = arith.constant 0.000000e+00 : f32
    %24 = vector.broadcast %cst_8 : f32 to vector<8x16xf32>
    %cst_9 = arith.constant 0.000000e+00 : f32
    %25 = vector.broadcast %cst_9 : f32 to vector<8x16xf32>
    %c-1_i32 = arith.constant -1 : i32
    %26 = arith.addi %21, %c-1_i32 : i32
    %c0_10 = arith.constant 0 : index
    %27 = arith.index_cast %26 : i32 to index
    %c0_11 = arith.constant 0 : index
    %28 = vector.load %arg3[%c0_10, %27, %c0_11] : memref<1x18x18xf32, #tpu.memory_space<vmem>>, vector<1x8x16xf32>
    %29 = vector.shape_cast %28 : vector<1x8x16xf32> to vector<8x16xf32>
    %c1_i32_12 = arith.constant 1 : i32
    %30 = vector.broadcast %c1_i32_12 : i32 to vector<8x16xi32>
    %31 = arith.cmpi sge, %2, %30 : vector<8x16xi32>
    %c1_i32_13 = arith.constant 1 : i32
    %32 = vector.broadcast %c1_i32_13 : i32 to vector<8x16xi32>
    %33 = arith.cmpi sge, %19, %32 : vector<8x16xi32>
    %34 = arith.andi %31, %33 : vector<8x16xi1>
    %cst_14 = arith.constant 0.000000e+00 : f32
    %35 = vector.broadcast %cst_14 : f32 to vector<8x16xf32>
    %36 = arith.select %34, %29, %35 : vector<8x16xi1>, vector<8x16xf32>
    %c0_15 = arith.constant 0 : index
    %c0_16 = arith.constant 0 : index
    %c0_17 = arith.constant 0 : index
    %c0_18 = arith.constant 0 : index
    %37 = vector.load %arg7[%c0_15, %c0_16, %c0_17, %c0_18] : memref<9x4x1x1xf32, #tpu.memory_space<vmem>>, vector<1x1x1x1xf32>
    %38 = vector.shape_cast %37 : vector<1x1x1x1xf32> to vector<1x1xf32>
    %39 = vector.broadcast %38 : vector<1x1xf32> to vector<8x16xf32>
    %40 = arith.mulf %36, %39 : vector<8x16xf32>
    %41 = arith.addf %22, %40 : vector<8x16xf32>
    %c0_19 = arith.constant 0 : index
    %c1 = arith.constant 1 : index
    %c0_20 = arith.constant 0 : index
    %c0_21 = arith.constant 0 : index
    %42 = vector.load %arg7[%c0_19, %c1, %c0_20, %c0_21] : memref<9x4x1x1xf32, #tpu.memory_space<vmem>>, vector<1x1x1x1xf32>
    %43 = vector.shape_cast %42 : vector<1x1x1x1xf32> to vector<1x1xf32>
    %44 = vector.broadcast %43 : vector<1x1xf32> to vector<8x16xf32>
    %45 = arith.mulf %36, %44 : vector<8x16xf32>
    %46 = arith.addf %23, %45 : vector<8x16xf32>
    %c0_22 = arith.constant 0 : index
    %c2 = arith.constant 2 : index
    %c0_23 = arith.constant 0 : index
    %c0_24 = arith.constant 0 : index
    %47 = vector.load %arg7[%c0_22, %c2, %c0_23, %c0_24] : memref<9x4x1x1xf32, #tpu.memory_space<vmem>>, vector<1x1x1x1xf32>
    %48 = vector.shape_cast %47 : vector<1x1x1x1xf32> to vector<1x1xf32>
    %49 = vector.broadcast %48 : vector<1x1xf32> to vector<8x16xf32>
    %50 = arith.mulf %36, %49 : vector<8x16xf32>
    %51 = arith.addf %24, %50 : vector<8x16xf32>
    %c0_25 = arith.constant 0 : index
    %c3 = arith.constant 3 : index
    %c0_26 = arith.constant 0 : index
    %c0_27 = arith.constant 0 : index
    %52 = vector.load %arg7[%c0_25, %c3, %c0_26, %c0_27] : memref<9x4x1x1xf32, #tpu.memory_space<vmem>>, vector<1x1x1x1xf32>
    %53 = vector.shape_cast %52 : vector<1x1x1x1xf32> to vector<1x1xf32>
    %54 = vector.broadcast %53 : vector<1x1xf32> to vector<8x16xf32>
    %55 = arith.mulf %36, %54 : vector<8x16xf32>
    %56 = arith.addf %25, %55 : vector<8x16xf32>
    %c-1_i32_28 = arith.constant -1 : i32
    %57 = arith.addi %21, %c-1_i32_28 : i32
    %c0_29 = arith.constant 0 : index
    %58 = arith.index_cast %57 : i32 to index
    %c1_30 = arith.constant 1 : index
    %59 = vector.load %arg3[%c0_29, %58, %c1_30] : memref<1x18x18xf32, #tpu.memory_space<vmem>>, vector<1x8x16xf32>
    %60 = vector.shape_cast %59 : vector<1x8x16xf32> to vector<8x16xf32>
    %c1_i32_31 = arith.constant 1 : i32
    %61 = vector.broadcast %c1_i32_31 : i32 to vector<8x16xi32>
    %62 = arith.cmpi sge, %2, %61 : vector<8x16xi32>
    %cst_32 = arith.constant 0.000000e+00 : f32
    %63 = vector.broadcast %cst_32 : f32 to vector<8x16xf32>
    %64 = arith.select %62, %60, %63 : vector<8x16xi1>, vector<8x16xf32>
    %c1_33 = arith.constant 1 : index
    %c0_34 = arith.constant 0 : index
    %c0_35 = arith.constant 0 : index
    %c0_36 = arith.constant 0 : index
    %65 = vector.load %arg7[%c1_33, %c0_34, %c0_35, %c0_36] : memref<9x4x1x1xf32, #tpu.memory_space<vmem>>, vector<1x1x1x1xf32>
    %66 = vector.shape_cast %65 : vector<1x1x1x1xf32> to vector<1x1xf32>
    %67 = vector.broadcast %66 : vector<1x1xf32> to vector<8x16xf32>
    %68 = arith.mulf %64, %67 : vector<8x16xf32>
    %69 = arith.addf %41, %68 : vector<8x16xf32>
    %c1_37 = arith.constant 1 : index
    %c1_38 = arith.constant 1 : index
    %c0_39 = arith.constant 0 : index
    %c0_40 = arith.constant 0 : index
    %70 = vector.load %arg7[%c1_37, %c1_38, %c0_39, %c0_40] : memref<9x4x1x1xf32, #tpu.memory_space<vmem>>, vector<1x1x1x1xf32>
    %71 = vector.shape_cast %70 : vector<1x1x1x1xf32> to vector<1x1xf32>
    %72 = vector.broadcast %71 : vector<1x1xf32> to vector<8x16xf32>
    %73 = arith.mulf %64, %72 : vector<8x16xf32>
    %74 = arith.addf %46, %73 : vector<8x16xf32>
    %c1_41 = arith.constant 1 : index
    %c2_42 = arith.constant 2 : index
    %c0_43 = arith.constant 0 : index
    %c0_44 = arith.constant 0 : index
    %75 = vector.load %arg7[%c1_41, %c2_42, %c0_43, %c0_44] : memref<9x4x1x1xf32, #tpu.memory_space<vmem>>, vector<1x1x1x1xf32>
    %76 = vector.shape_cast %75 : vector<1x1x1x1xf32> to vector<1x1xf32>
    %77 = vector.broadcast %76 : vector<1x1xf32> to vector<8x16xf32>
    %78 = arith.mulf %64, %77 : vector<8x16xf32>
    %79 = arith.addf %51, %78 : vector<8x16xf32>
    %c1_45 = arith.constant 1 : index
    %c3_46 = arith.constant 3 : index
    %c0_47 = arith.constant 0 : index
    %c0_48 = arith.constant 0 : index
    %80 = vector.load %arg7[%c1_45, %c3_46, %c0_47, %c0_48] : memref<9x4x1x1xf32, #tpu.memory_space<vmem>>, vector<1x1x1x1xf32>
    %81 = vector.shape_cast %80 : vector<1x1x1x1xf32> to vector<1x1xf32>
    %82 = vector.broadcast %81 : vector<1x1xf32> to vector<8x16xf32>
    %83 = arith.mulf %64, %82 : vector<8x16xf32>
    %84 = arith.addf %56, %83 : vector<8x16xf32>
    %c-1_i32_49 = arith.constant -1 : i32
    %85 = arith.addi %21, %c-1_i32_49 : i32
    %c0_50 = arith.constant 0 : index
    %86 = arith.index_cast %85 : i32 to index
    %c2_51 = arith.constant 2 : index
    %87 = vector.load %arg3[%c0_50, %86, %c2_51] : memref<1x18x18xf32, #tpu.memory_space<vmem>>, vector<1x8x16xf32>
    %88 = vector.shape_cast %87 : vector<1x8x16xf32> to vector<8x16xf32>
    %c1_i32_52 = arith.constant 1 : i32
    %89 = vector.broadcast %c1_i32_52 : i32 to vector<8x16xi32>
    %90 = arith.cmpi sge, %2, %89 : vector<8x16xi32>
    %c6_i32 = arith.constant 6 : i32
    %91 = vector.broadcast %c6_i32 : i32 to vector<8x16xi32>
    %92 = arith.cmpi sle, %19, %91 : vector<8x16xi32>
    %93 = arith.andi %90, %92 : vector<8x16xi1>
    %cst_53 = arith.constant 0.000000e+00 : f32
    %94 = vector.broadcast %cst_53 : f32 to vector<8x16xf32>
    %95 = arith.select %93, %88, %94 : vector<8x16xi1>, vector<8x16xf32>
    %c2_54 = arith.constant 2 : index
    %c0_55 = arith.constant 0 : index
    %c0_56 = arith.constant 0 : index
    %c0_57 = arith.constant 0 : index
    %96 = vector.load %arg7[%c2_54, %c0_55, %c0_56, %c0_57] : memref<9x4x1x1xf32, #tpu.memory_space<vmem>>, vector<1x1x1x1xf32>
    %97 = vector.shape_cast %96 : vector<1x1x1x1xf32> to vector<1x1xf32>
    %98 = vector.broadcast %97 : vector<1x1xf32> to vector<8x16xf32>
    %99 = arith.mulf %95, %98 : vector<8x16xf32>
    %100 = arith.addf %69, %99 : vector<8x16xf32>
    %c2_58 = arith.constant 2 : index
    %c1_59 = arith.constant 1 : index
    %c0_60 = arith.constant 0 : index
    %c0_61 = arith.constant 0 : index
    %101 = vector.load %arg7[%c2_58, %c1_59, %c0_60, %c0_61] : memref<9x4x1x1xf32, #tpu.memory_space<vmem>>, vector<1x1x1x1xf32>
    %102 = vector.shape_cast %101 : vector<1x1x1x1xf32> to vector<1x1xf32>
    %103 = vector.broadcast %102 : vector<1x1xf32> to vector<8x16xf32>
    %104 = arith.mulf %95, %103 : vector<8x16xf32>
    %105 = arith.addf %74, %104 : vector<8x16xf32>
    %c2_62 = arith.constant 2 : index
    %c2_63 = arith.constant 2 : index
    %c0_64 = arith.constant 0 : index
    %c0_65 = arith.constant 0 : index
    %106 = vector.load %arg7[%c2_62, %c2_63, %c0_64, %c0_65] : memref<9x4x1x1xf32, #tpu.memory_space<vmem>>, vector<1x1x1x1xf32>
    %107 = vector.shape_cast %106 : vector<1x1x1x1xf32> to vector<1x1xf32>
    %108 = vector.broadcast %107 : vector<1x1xf32> to vector<8x16xf32>
    %109 = arith.mulf %95, %108 : vector<8x16xf32>
    %110 = arith.addf %79, %109 : vector<8x16xf32>
    %c2_66 = arith.constant 2 : index
    %c3_67 = arith.constant 3 : index
    %c0_68 = arith.constant 0 : index
    %c0_69 = arith.constant 0 : index
    %111 = vector.load %arg7[%c2_66, %c3_67, %c0_68, %c0_69] : memref<9x4x1x1xf32, #tpu.memory_space<vmem>>, vector<1x1x1x1xf32>
    %112 = vector.shape_cast %111 : vector<1x1x1x1xf32> to vector<1x1xf32>
    %113 = vector.broadcast %112 : vector<1x1xf32> to vector<8x16xf32>
    %114 = arith.mulf %95, %113 : vector<8x16xf32>
    %115 = arith.addf %84, %114 : vector<8x16xf32>
    %c0_i32_70 = arith.constant 0 : i32
    %116 = arith.addi %21, %c0_i32_70 : i32
    %c0_71 = arith.constant 0 : index
    %117 = arith.index_cast %116 : i32 to index
    %c0_72 = arith.constant 0 : index
    %118 = vector.load %arg3[%c0_71, %117, %c0_72] : memref<1x18x18xf32, #tpu.memory_space<vmem>>, vector<1x8x16xf32>
    %119 = vector.shape_cast %118 : vector<1x8x16xf32> to vector<8x16xf32>
    %c1_i32_73 = arith.constant 1 : i32
    %120 = vector.broadcast %c1_i32_73 : i32 to vector<8x16xi32>
    %121 = arith.cmpi sge, %19, %120 : vector<8x16xi32>
    %cst_74 = arith.constant 0.000000e+00 : f32
    %122 = vector.broadcast %cst_74 : f32 to vector<8x16xf32>
    %123 = arith.select %121, %119, %122 : vector<8x16xi1>, vector<8x16xf32>
    %c3_75 = arith.constant 3 : index
    %c0_76 = arith.constant 0 : index
    %c0_77 = arith.constant 0 : index
    %c0_78 = arith.constant 0 : index
    %124 = vector.load %arg7[%c3_75, %c0_76, %c0_77, %c0_78] : memref<9x4x1x1xf32, #tpu.memory_space<vmem>>, vector<1x1x1x1xf32>
    %125 = vector.shape_cast %124 : vector<1x1x1x1xf32> to vector<1x1xf32>
    %126 = vector.broadcast %125 : vector<1x1xf32> to vector<8x16xf32>
    %127 = arith.mulf %123, %126 : vector<8x16xf32>
    %128 = arith.addf %100, %127 : vector<8x16xf32>
    %c3_79 = arith.constant 3 : index
    %c1_80 = arith.constant 1 : index
    %c0_81 = arith.constant 0 : index
    %c0_82 = arith.constant 0 : index
    %129 = vector.load %arg7[%c3_79, %c1_80, %c0_81, %c0_82] : memref<9x4x1x1xf32, #tpu.memory_space<vmem>>, vector<1x1x1x1xf32>
    %130 = vector.shape_cast %129 : vector<1x1x1x1xf32> to vector<1x1xf32>
    %131 = vector.broadcast %130 : vector<1x1xf32> to vector<8x16xf32>
    %132 = arith.mulf %123, %131 : vector<8x16xf32>
    %133 = arith.addf %105, %132 : vector<8x16xf32>
    %c3_83 = arith.constant 3 : index
    %c2_84 = arith.constant 2 : index
    %c0_85 = arith.constant 0 : index
    %c0_86 = arith.constant 0 : index
    %134 = vector.load %arg7[%c3_83, %c2_84, %c0_85, %c0_86] : memref<9x4x1x1xf32, #tpu.memory_space<vmem>>, vector<1x1x1x1xf32>
    %135 = vector.shape_cast %134 : vector<1x1x1x1xf32> to vector<1x1xf32>
    %136 = vector.broadcast %135 : vector<1x1xf32> to vector<8x16xf32>
    %137 = arith.mulf %123, %136 : vector<8x16xf32>
    %138 = arith.addf %110, %137 : vector<8x16xf32>
    %c3_87 = arith.constant 3 : index
    %c3_88 = arith.constant 3 : index
    %c0_89 = arith.constant 0 : index
    %c0_90 = arith.constant 0 : index
    %139 = vector.load %arg7[%c3_87, %c3_88, %c0_89, %c0_90] : memref<9x4x1x1xf32, #tpu.memory_space<vmem>>, vector<1x1x1x1xf32>
    %140 = vector.shape_cast %139 : vector<1x1x1x1xf32> to vector<1x1xf32>
    %141 = vector.broadcast %140 : vector<1x1xf32> to vector<8x16xf32>
    %142 = arith.mulf %123, %141 : vector<8x16xf32>
    %143 = arith.addf %115, %142 : vector<8x16xf32>
    %c0_i32_91 = arith.constant 0 : i32
    %144 = arith.addi %21, %c0_i32_91 : i32
    %c0_92 = arith.constant 0 : index
    %145 = arith.index_cast %144 : i32 to index
    %c1_93 = arith.constant 1 : index
    %146 = vector.load %arg3[%c0_92, %145, %c1_93] : memref<1x18x18xf32, #tpu.memory_space<vmem>>, vector<1x8x16xf32>
    %147 = vector.shape_cast %146 : vector<1x8x16xf32> to vector<8x16xf32>
    %c4 = arith.constant 4 : index
    %c0_94 = arith.constant 0 : index
    %c0_95 = arith.constant 0 : index
    %c0_96 = arith.constant 0 : index
    %148 = vector.load %arg7[%c4, %c0_94, %c0_95, %c0_96] : memref<9x4x1x1xf32, #tpu.memory_space<vmem>>, vector<1x1x1x1xf32>
    %149 = vector.shape_cast %148 : vector<1x1x1x1xf32> to vector<1x1xf32>
    %150 = vector.broadcast %149 : vector<1x1xf32> to vector<8x16xf32>
    %151 = arith.mulf %147, %150 : vector<8x16xf32>
    %152 = arith.addf %128, %151 : vector<8x16xf32>
    %c4_97 = arith.constant 4 : index
    %c1_98 = arith.constant 1 : index
    %c0_99 = arith.constant 0 : index
    %c0_100 = arith.constant 0 : index
    %153 = vector.load %arg7[%c4_97, %c1_98, %c0_99, %c0_100] : memref<9x4x1x1xf32, #tpu.memory_space<vmem>>, vector<1x1x1x1xf32>
    %154 = vector.shape_cast %153 : vector<1x1x1x1xf32> to vector<1x1xf32>
    %155 = vector.broadcast %154 : vector<1x1xf32> to vector<8x16xf32>
    %156 = arith.mulf %147, %155 : vector<8x16xf32>
    %157 = arith.addf %133, %156 : vector<8x16xf32>
    %c4_101 = arith.constant 4 : index
    %c2_102 = arith.constant 2 : index
    %c0_103 = arith.constant 0 : index
    %c0_104 = arith.constant 0 : index
    %158 = vector.load %arg7[%c4_101, %c2_102, %c0_103, %c0_104] : memref<9x4x1x1xf32, #tpu.memory_space<vmem>>, vector<1x1x1x1xf32>
    %159 = vector.shape_cast %158 : vector<1x1x1x1xf32> to vector<1x1xf32>
    %160 = vector.broadcast %159 : vector<1x1xf32> to vector<8x16xf32>
    %161 = arith.mulf %147, %160 : vector<8x16xf32>
    %162 = arith.addf %138, %161 : vector<8x16xf32>
    %c4_105 = arith.constant 4 : index
    %c3_106 = arith.constant 3 : index
    %c0_107 = arith.constant 0 : index
    %c0_108 = arith.constant 0 : index
    %163 = vector.load %arg7[%c4_105, %c3_106, %c0_107, %c0_108] : memref<9x4x1x1xf32, #tpu.memory_space<vmem>>, vector<1x1x1x1xf32>
    %164 = vector.shape_cast %163 : vector<1x1x1x1xf32> to vector<1x1xf32>
    %165 = vector.broadcast %164 : vector<1x1xf32> to vector<8x16xf32>
    %166 = arith.mulf %147, %165 : vector<8x16xf32>
    %167 = arith.addf %143, %166 : vector<8x16xf32>
    %c0_i32_109 = arith.constant 0 : i32
    %168 = arith.addi %21, %c0_i32_109 : i32
    %c0_110 = arith.constant 0 : index
    %169 = arith.index_cast %168 : i32 to index
    %c2_111 = arith.constant 2 : index
    %170 = vector.load %arg3[%c0_110, %169, %c2_111] : memref<1x18x18xf32, #tpu.memory_space<vmem>>, vector<1x8x16xf32>
    %171 = vector.shape_cast %170 : vector<1x8x16xf32> to vector<8x16xf32>
    %c6_i32_112 = arith.constant 6 : i32
    %172 = vector.broadcast %c6_i32_112 : i32 to vector<8x16xi32>
    %173 = arith.cmpi sle, %19, %172 : vector<8x16xi32>
    %cst_113 = arith.constant 0.000000e+00 : f32
    %174 = vector.broadcast %cst_113 : f32 to vector<8x16xf32>
    %175 = arith.select %173, %171, %174 : vector<8x16xi1>, vector<8x16xf32>
    %c5 = arith.constant 5 : index
    %c0_114 = arith.constant 0 : index
    %c0_115 = arith.constant 0 : index
    %c0_116 = arith.constant 0 : index
    %176 = vector.load %arg7[%c5, %c0_114, %c0_115, %c0_116] : memref<9x4x1x1xf32, #tpu.memory_space<vmem>>, vector<1x1x1x1xf32>
    %177 = vector.shape_cast %176 : vector<1x1x1x1xf32> to vector<1x1xf32>
    %178 = vector.broadcast %177 : vector<1x1xf32> to vector<8x16xf32>
    %179 = arith.mulf %175, %178 : vector<8x16xf32>
    %180 = arith.addf %152, %179 : vector<8x16xf32>
    %c5_117 = arith.constant 5 : index
    %c1_118 = arith.constant 1 : index
    %c0_119 = arith.constant 0 : index
    %c0_120 = arith.constant 0 : index
    %181 = vector.load %arg7[%c5_117, %c1_118, %c0_119, %c0_120] : memref<9x4x1x1xf32, #tpu.memory_space<vmem>>, vector<1x1x1x1xf32>
    %182 = vector.shape_cast %181 : vector<1x1x1x1xf32> to vector<1x1xf32>
    %183 = vector.broadcast %182 : vector<1x1xf32> to vector<8x16xf32>
    %184 = arith.mulf %175, %183 : vector<8x16xf32>
    %185 = arith.addf %157, %184 : vector<8x16xf32>
    %c5_121 = arith.constant 5 : index
    %c2_122 = arith.constant 2 : index
    %c0_123 = arith.constant 0 : index
    %c0_124 = arith.constant 0 : index
    %186 = vector.load %arg7[%c5_121, %c2_122, %c0_123, %c0_124] : memref<9x4x1x1xf32, #tpu.memory_space<vmem>>, vector<1x1x1x1xf32>
    %187 = vector.shape_cast %186 : vector<1x1x1x1xf32> to vector<1x1xf32>
    %188 = vector.broadcast %187 : vector<1x1xf32> to vector<8x16xf32>
    %189 = arith.mulf %175, %188 : vector<8x16xf32>
    %190 = arith.addf %162, %189 : vector<8x16xf32>
    %c5_125 = arith.constant 5 : index
    %c3_126 = arith.constant 3 : index
    %c0_127 = arith.constant 0 : index
    %c0_128 = arith.constant 0 : index
    %191 = vector.load %arg7[%c5_125, %c3_126, %c0_127, %c0_128] : memref<9x4x1x1xf32, #tpu.memory_space<vmem>>, vector<1x1x1x1xf32>
    %192 = vector.shape_cast %191 : vector<1x1x1x1xf32> to vector<1x1xf32>
    %193 = vector.broadcast %192 : vector<1x1xf32> to vector<8x16xf32>
    %194 = arith.mulf %175, %193 : vector<8x16xf32>
    %195 = arith.addf %167, %194 : vector<8x16xf32>
    %c1_i32_129 = arith.constant 1 : i32
    %196 = arith.addi %21, %c1_i32_129 : i32
    %c0_130 = arith.constant 0 : index
    %197 = arith.index_cast %196 : i32 to index
    %c0_131 = arith.constant 0 : index
    %198 = vector.load %arg3[%c0_130, %197, %c0_131] : memref<1x18x18xf32, #tpu.memory_space<vmem>>, vector<1x8x16xf32>
    %199 = vector.shape_cast %198 : vector<1x8x16xf32> to vector<8x16xf32>
    %c6_i32_132 = arith.constant 6 : i32
    %200 = vector.broadcast %c6_i32_132 : i32 to vector<8x16xi32>
    %201 = arith.cmpi sle, %2, %200 : vector<8x16xi32>
    %c1_i32_133 = arith.constant 1 : i32
    %202 = vector.broadcast %c1_i32_133 : i32 to vector<8x16xi32>
    %203 = arith.cmpi sge, %19, %202 : vector<8x16xi32>
    %204 = arith.andi %201, %203 : vector<8x16xi1>
    %cst_134 = arith.constant 0.000000e+00 : f32
    %205 = vector.broadcast %cst_134 : f32 to vector<8x16xf32>
    %206 = arith.select %204, %199, %205 : vector<8x16xi1>, vector<8x16xf32>
    %c6 = arith.constant 6 : index
    %c0_135 = arith.constant 0 : index
    %c0_136 = arith.constant 0 : index
    %c0_137 = arith.constant 0 : index
    %207 = vector.load %arg7[%c6, %c0_135, %c0_136, %c0_137] : memref<9x4x1x1xf32, #tpu.memory_space<vmem>>, vector<1x1x1x1xf32>
    %208 = vector.shape_cast %207 : vector<1x1x1x1xf32> to vector<1x1xf32>
    %209 = vector.broadcast %208 : vector<1x1xf32> to vector<8x16xf32>
    %210 = arith.mulf %206, %209 : vector<8x16xf32>
    %211 = arith.addf %180, %210 : vector<8x16xf32>
    %c6_138 = arith.constant 6 : index
    %c1_139 = arith.constant 1 : index
    %c0_140 = arith.constant 0 : index
    %c0_141 = arith.constant 0 : index
    %212 = vector.load %arg7[%c6_138, %c1_139, %c0_140, %c0_141] : memref<9x4x1x1xf32, #tpu.memory_space<vmem>>, vector<1x1x1x1xf32>
    %213 = vector.shape_cast %212 : vector<1x1x1x1xf32> to vector<1x1xf32>
    %214 = vector.broadcast %213 : vector<1x1xf32> to vector<8x16xf32>
    %215 = arith.mulf %206, %214 : vector<8x16xf32>
    %216 = arith.addf %185, %215 : vector<8x16xf32>
    %c6_142 = arith.constant 6 : index
    %c2_143 = arith.constant 2 : index
    %c0_144 = arith.constant 0 : index
    %c0_145 = arith.constant 0 : index
    %217 = vector.load %arg7[%c6_142, %c2_143, %c0_144, %c0_145] : memref<9x4x1x1xf32, #tpu.memory_space<vmem>>, vector<1x1x1x1xf32>
    %218 = vector.shape_cast %217 : vector<1x1x1x1xf32> to vector<1x1xf32>
    %219 = vector.broadcast %218 : vector<1x1xf32> to vector<8x16xf32>
    %220 = arith.mulf %206, %219 : vector<8x16xf32>
    %221 = arith.addf %190, %220 : vector<8x16xf32>
    %c6_146 = arith.constant 6 : index
    %c3_147 = arith.constant 3 : index
    %c0_148 = arith.constant 0 : index
    %c0_149 = arith.constant 0 : index
    %222 = vector.load %arg7[%c6_146, %c3_147, %c0_148, %c0_149] : memref<9x4x1x1xf32, #tpu.memory_space<vmem>>, vector<1x1x1x1xf32>
    %223 = vector.shape_cast %222 : vector<1x1x1x1xf32> to vector<1x1xf32>
    %224 = vector.broadcast %223 : vector<1x1xf32> to vector<8x16xf32>
    %225 = arith.mulf %206, %224 : vector<8x16xf32>
    %226 = arith.addf %195, %225 : vector<8x16xf32>
    %c1_i32_150 = arith.constant 1 : i32
    %227 = arith.addi %21, %c1_i32_150 : i32
    %c0_151 = arith.constant 0 : index
    %228 = arith.index_cast %227 : i32 to index
    %c1_152 = arith.constant 1 : index
    %229 = vector.load %arg3[%c0_151, %228, %c1_152] : memref<1x18x18xf32, #tpu.memory_space<vmem>>, vector<1x8x16xf32>
    %230 = vector.shape_cast %229 : vector<1x8x16xf32> to vector<8x16xf32>
    %c6_i32_153 = arith.constant 6 : i32
    %231 = vector.broadcast %c6_i32_153 : i32 to vector<8x16xi32>
    %232 = arith.cmpi sle, %2, %231 : vector<8x16xi32>
    %cst_154 = arith.constant 0.000000e+00 : f32
    %233 = vector.broadcast %cst_154 : f32 to vector<8x16xf32>
    %234 = arith.select %232, %230, %233 : vector<8x16xi1>, vector<8x16xf32>
    %c7 = arith.constant 7 : index
    %c0_155 = arith.constant 0 : index
    %c0_156 = arith.constant 0 : index
    %c0_157 = arith.constant 0 : index
    %235 = vector.load %arg7[%c7, %c0_155, %c0_156, %c0_157] : memref<9x4x1x1xf32, #tpu.memory_space<vmem>>, vector<1x1x1x1xf32>
    %236 = vector.shape_cast %235 : vector<1x1x1x1xf32> to vector<1x1xf32>
    %237 = vector.broadcast %236 : vector<1x1xf32> to vector<8x16xf32>
    %238 = arith.mulf %234, %237 : vector<8x16xf32>
    %239 = arith.addf %211, %238 : vector<8x16xf32>
    %c7_158 = arith.constant 7 : index
    %c1_159 = arith.constant 1 : index
    %c0_160 = arith.constant 0 : index
    %c0_161 = arith.constant 0 : index
    %240 = vector.load %arg7[%c7_158, %c1_159, %c0_160, %c0_161] : memref<9x4x1x1xf32, #tpu.memory_space<vmem>>, vector<1x1x1x1xf32>
    %241 = vector.shape_cast %240 : vector<1x1x1x1xf32> to vector<1x1xf32>
    %242 = vector.broadcast %241 : vector<1x1xf32> to vector<8x16xf32>
    %243 = arith.mulf %234, %242 : vector<8x16xf32>
    %244 = arith.addf %216, %243 : vector<8x16xf32>
    %c7_162 = arith.constant 7 : index
    %c2_163 = arith.constant 2 : index
    %c0_164 = arith.constant 0 : index
    %c0_165 = arith.constant 0 : index
    %245 = vector.load %arg7[%c7_162, %c2_163, %c0_164, %c0_165] : memref<9x4x1x1xf32, #tpu.memory_space<vmem>>, vector<1x1x1x1xf32>
    %246 = vector.shape_cast %245 : vector<1x1x1x1xf32> to vector<1x1xf32>
    %247 = vector.broadcast %246 : vector<1x1xf32> to vector<8x16xf32>
    %248 = arith.mulf %234, %247 : vector<8x16xf32>
    %249 = arith.addf %221, %248 : vector<8x16xf32>
    %c7_166 = arith.constant 7 : index
    %c3_167 = arith.constant 3 : index
    %c0_168 = arith.constant 0 : index
    %c0_169 = arith.constant 0 : index
    %250 = vector.load %arg7[%c7_166, %c3_167, %c0_168, %c0_169] : memref<9x4x1x1xf32, #tpu.memory_space<vmem>>, vector<1x1x1x1xf32>
    %251 = vector.shape_cast %250 : vector<1x1x1x1xf32> to vector<1x1xf32>
    %252 = vector.broadcast %251 : vector<1x1xf32> to vector<8x16xf32>
    %253 = arith.mulf %234, %252 : vector<8x16xf32>
    %254 = arith.addf %226, %253 : vector<8x16xf32>
    %c1_i32_170 = arith.constant 1 : i32
    %255 = arith.addi %21, %c1_i32_170 : i32
    %c0_171 = arith.constant 0 : index
    %256 = arith.index_cast %255 : i32 to index
    %c2_172 = arith.constant 2 : index
    %257 = vector.load %arg3[%c0_171, %256, %c2_172] : memref<1x18x18xf32, #tpu.memory_space<vmem>>, vector<1x8x16xf32>
    %258 = vector.shape_cast %257 : vector<1x8x16xf32> to vector<8x16xf32>
    %c6_i32_173 = arith.constant 6 : i32
    %259 = vector.broadcast %c6_i32_173 : i32 to vector<8x16xi32>
    %260 = arith.cmpi sle, %2, %259 : vector<8x16xi32>
    %c6_i32_174 = arith.constant 6 : i32
    %261 = vector.broadcast %c6_i32_174 : i32 to vector<8x16xi32>
    %262 = arith.cmpi sle, %19, %261 : vector<8x16xi32>
    %263 = arith.andi %260, %262 : vector<8x16xi1>
    %cst_175 = arith.constant 0.000000e+00 : f32
    %264 = vector.broadcast %cst_175 : f32 to vector<8x16xf32>
    %265 = arith.select %263, %258, %264 : vector<8x16xi1>, vector<8x16xf32>
    %c8 = arith.constant 8 : index
    %c0_176 = arith.constant 0 : index
    %c0_177 = arith.constant 0 : index
    %c0_178 = arith.constant 0 : index
    %266 = vector.load %arg7[%c8, %c0_176, %c0_177, %c0_178] : memref<9x4x1x1xf32, #tpu.memory_space<vmem>>, vector<1x1x1x1xf32>
    %267 = vector.shape_cast %266 : vector<1x1x1x1xf32> to vector<1x1xf32>
    %268 = vector.broadcast %267 : vector<1x1xf32> to vector<8x16xf32>
    %269 = arith.mulf %265, %268 : vector<8x16xf32>
    %270 = arith.addf %239, %269 : vector<8x16xf32>
    %c8_179 = arith.constant 8 : index
    %c1_180 = arith.constant 1 : index
    %c0_181 = arith.constant 0 : index
    %c0_182 = arith.constant 0 : index
    %271 = vector.load %arg7[%c8_179, %c1_180, %c0_181, %c0_182] : memref<9x4x1x1xf32, #tpu.memory_space<vmem>>, vector<1x1x1x1xf32>
    %272 = vector.shape_cast %271 : vector<1x1x1x1xf32> to vector<1x1xf32>
    %273 = vector.broadcast %272 : vector<1x1xf32> to vector<8x16xf32>
    %274 = arith.mulf %265, %273 : vector<8x16xf32>
    %275 = arith.addf %244, %274 : vector<8x16xf32>
    %c8_183 = arith.constant 8 : index
    %c2_184 = arith.constant 2 : index
    %c0_185 = arith.constant 0 : index
    %c0_186 = arith.constant 0 : index
    %276 = vector.load %arg7[%c8_183, %c2_184, %c0_185, %c0_186] : memref<9x4x1x1xf32, #tpu.memory_space<vmem>>, vector<1x1x1x1xf32>
    %277 = vector.shape_cast %276 : vector<1x1x1x1xf32> to vector<1x1xf32>
    %278 = vector.broadcast %277 : vector<1x1xf32> to vector<8x16xf32>
    %279 = arith.mulf %265, %278 : vector<8x16xf32>
    %280 = arith.addf %249, %279 : vector<8x16xf32>
    %c8_187 = arith.constant 8 : index
    %c3_188 = arith.constant 3 : index
    %c0_189 = arith.constant 0 : index
    %c0_190 = arith.constant 0 : index
    %281 = vector.load %arg7[%c8_187, %c3_188, %c0_189, %c0_190] : memref<9x4x1x1xf32, #tpu.memory_space<vmem>>, vector<1x1x1x1xf32>
    %282 = vector.shape_cast %281 : vector<1x1x1x1xf32> to vector<1x1xf32>
    %283 = vector.broadcast %282 : vector<1x1xf32> to vector<8x16xf32>
    %284 = arith.mulf %265, %283 : vector<8x16xf32>
    %285 = arith.addf %254, %284 : vector<8x16xf32>
    %c0_191 = arith.constant 0 : index
    %c0_192 = arith.constant 0 : index
    %c0_193 = arith.constant 0 : index
    %c0_194 = arith.constant 0 : index
    %286 = vector.load %arg4[%c0_191, %c0_192, %c0_193, %c0_194] : memref<1x2x8x16xf32, #tpu.memory_space<vmem>>, vector<1x1x8x16xf32>
    %287 = vector.shape_cast %286 : vector<1x1x8x16xf32> to vector<8x16xf32>
    %cst_195 = arith.constant dense<0.000000e+00> : vector<8x16xf32>
    %288 = tpu.matmul %287, %1, %cst_195 {dimension_numbers = #tpu.dot_dimension_numbers<[1], [0], [0], [1], [0, 0, 1, 1], [], []>} : vector<8x16xf32>, vector<16x16xf32>, vector<8x16xf32> -> vector<8x16xf32>
    %c0_196 = arith.constant 0 : index
    %c0_197 = arith.constant 0 : index
    %289 = vector.load %arg5[%c0_196, %c0_197] : memref<16x32xf32, #tpu.memory_space<vmem>>, vector<16x32xf32>
    %cst_198 = arith.constant dense<0.000000e+00> : vector<8x32xf32>
    %290 = tpu.matmul %288, %289, %cst_198 {dimension_numbers = #tpu.dot_dimension_numbers<[1], [0], [0], [1], [0, 0, 1, 1], [], []>} : vector<8x16xf32>, vector<16x32xf32>, vector<8x32xf32> -> vector<8x32xf32>
    %c0_199 = arith.constant 0 : index
    %c0_200 = arith.constant 0 : index
    %c0_201 = arith.constant 0 : index
    %291 = vector.load %arg6[%c0_199, %c0_200, %c0_201] : memref<2x16x32xf32, #tpu.memory_space<vmem>>, vector<1x16x32xf32>
    %292 = vector.shape_cast %291 : vector<1x16x32xf32> to vector<16x32xf32>
    %cst_202 = arith.constant dense<0.000000e+00> : vector<8x32xf32>
    %293 = tpu.matmul %270, %292, %cst_202 {dimension_numbers = #tpu.dot_dimension_numbers<[1], [0], [0], [1], [0, 0, 1, 1], [], []>} : vector<8x16xf32>, vector<16x32xf32>, vector<8x32xf32> -> vector<8x32xf32>
    %294 = arith.addf %290, %293 : vector<8x32xf32>
    %c1_203 = arith.constant 1 : index
    %c0_204 = arith.constant 0 : index
    %c0_205 = arith.constant 0 : index
    %295 = vector.load %arg6[%c1_203, %c0_204, %c0_205] : memref<2x16x32xf32, #tpu.memory_space<vmem>>, vector<1x16x32xf32>
    %296 = vector.shape_cast %295 : vector<1x16x32xf32> to vector<16x32xf32>
    %cst_206 = arith.constant dense<0.000000e+00> : vector<8x32xf32>
    %297 = tpu.matmul %275, %296, %cst_206 {dimension_numbers = #tpu.dot_dimension_numbers<[1], [0], [0], [1], [0, 0, 1, 1], [], []>} : vector<8x16xf32>, vector<16x32xf32>, vector<8x32xf32> -> vector<8x32xf32>
    %298 = arith.addf %294, %297 : vector<8x32xf32>
    %c0_207 = arith.constant 0 : index
    %c0_208 = arith.constant 0 : index
    %c0_209 = arith.constant 0 : index
    %299 = vector.load %arg8[%c0_207, %c0_208, %c0_209] : memref<2x1x32xf32, #tpu.memory_space<vmem>>, vector<1x1x32xf32>
    %300 = vector.shape_cast %299 : vector<1x1x32xf32> to vector<1x32xf32>
    %301 = vector.broadcast %300 : vector<1x32xf32> to vector<8x32xf32>
    %302 = arith.addf %298, %301 : vector<8x32xf32>
    %c0_210 = arith.constant 0 : index
    %c1_211 = arith.constant 1 : index
    %c0_212 = arith.constant 0 : index
    %c0_213 = arith.constant 0 : index
    %303 = vector.load %arg4[%c0_210, %c1_211, %c0_212, %c0_213] : memref<1x2x8x16xf32, #tpu.memory_space<vmem>>, vector<1x1x8x16xf32>
    %304 = vector.shape_cast %303 : vector<1x1x8x16xf32> to vector<8x16xf32>
    %cst_214 = arith.constant dense<0.000000e+00> : vector<8x16xf32>
    %305 = tpu.matmul %304, %1, %cst_214 {dimension_numbers = #tpu.dot_dimension_numbers<[1], [0], [0], [1], [0, 0, 1, 1], [], []>} : vector<8x16xf32>, vector<16x16xf32>, vector<8x16xf32> -> vector<8x16xf32>
    %c0_215 = arith.constant 0 : index
    %c0_216 = arith.constant 0 : index
    %306 = vector.load %arg5[%c0_215, %c0_216] : memref<16x32xf32, #tpu.memory_space<vmem>>, vector<16x32xf32>
    %cst_217 = arith.constant dense<0.000000e+00> : vector<8x32xf32>
    %307 = tpu.matmul %305, %306, %cst_217 {dimension_numbers = #tpu.dot_dimension_numbers<[1], [0], [0], [1], [0, 0, 1, 1], [], []>} : vector<8x16xf32>, vector<16x32xf32>, vector<8x32xf32> -> vector<8x32xf32>
    %c0_218 = arith.constant 0 : index
    %c0_219 = arith.constant 0 : index
    %c0_220 = arith.constant 0 : index
    %308 = vector.load %arg6[%c0_218, %c0_219, %c0_220] : memref<2x16x32xf32, #tpu.memory_space<vmem>>, vector<1x16x32xf32>
    %309 = vector.shape_cast %308 : vector<1x16x32xf32> to vector<16x32xf32>
    %cst_221 = arith.constant dense<0.000000e+00> : vector<8x32xf32>
    %310 = tpu.matmul %280, %309, %cst_221 {dimension_numbers = #tpu.dot_dimension_numbers<[1], [0], [0], [1], [0, 0, 1, 1], [], []>} : vector<8x16xf32>, vector<16x32xf32>, vector<8x32xf32> -> vector<8x32xf32>
    %311 = arith.addf %307, %310 : vector<8x32xf32>
    %c1_222 = arith.constant 1 : index
    %c0_223 = arith.constant 0 : index
    %c0_224 = arith.constant 0 : index
    %312 = vector.load %arg6[%c1_222, %c0_223, %c0_224] : memref<2x16x32xf32, #tpu.memory_space<vmem>>, vector<1x16x32xf32>
    %313 = vector.shape_cast %312 : vector<1x16x32xf32> to vector<16x32xf32>
    %cst_225 = arith.constant dense<0.000000e+00> : vector<8x32xf32>
    %314 = tpu.matmul %285, %313, %cst_225 {dimension_numbers = #tpu.dot_dimension_numbers<[1], [0], [0], [1], [0, 0, 1, 1], [], []>} : vector<8x16xf32>, vector<16x32xf32>, vector<8x32xf32> -> vector<8x32xf32>
    %315 = arith.addf %311, %314 : vector<8x32xf32>
    %c1_226 = arith.constant 1 : index
    %c0_227 = arith.constant 0 : index
    %c0_228 = arith.constant 0 : index
    %316 = vector.load %arg8[%c1_226, %c0_227, %c0_228] : memref<2x1x32xf32, #tpu.memory_space<vmem>>, vector<1x1x32xf32>
    %317 = vector.shape_cast %316 : vector<1x1x32xf32> to vector<1x32xf32>
    %318 = vector.broadcast %317 : vector<1x32xf32> to vector<8x32xf32>
    %319 = arith.addf %315, %318 : vector<8x32xf32>
    %320 = tpu.concatenate %302, %319 in 1 : vector<8x32xf32>, vector<8x32xf32> -> vector<8x64xf32>
    %c0_229 = arith.constant 0 : index
    %c0_230 = arith.constant 0 : index
    %c0_231 = arith.constant 0 : index
    %321 = vector.load %arg9[%c0_229, %c0_230, %c0_231] : memref<1x8x64xf32, #tpu.memory_space<vmem>>, vector<1x8x64xf32>
    %322 = vector.shape_cast %321 : vector<1x8x64xf32> to vector<8x64xf32>
    %323 = vector.shape_cast %320 : vector<8x64xf32> to vector<1x8x64xf32>
    tpu.vector_store %arg9[%c0_229, %c0_230, %c0_231], %323 {strides = array<i32>} : memref<1x8x64xf32, #tpu.memory_space<vmem>>, vector<1x8x64xf32>,
    return
  }
  func.func @transform_0(%arg0: i32, %arg1: i32) -> (i32, i32, i32) {
    %c0_i32 = arith.constant 0 : i32
    %c0_i32_0 = arith.constant 0 : i32
    %c0_i32_1 = arith.constant 0 : i32
    return %arg0, %c0_i32, %c0_i32_0 : i32, i32, i32
  }
  func.func @transform_1(%arg0: i32, %arg1: i32) -> (i32, i32, i32) {
    %c0_i32 = arith.constant 0 : i32
    %c0_i32_0 = arith.constant 0 : i32
    %c0_i32_1 = arith.constant 0 : i32
    return %arg0, %c0_i32, %c0_i32_0 : i32, i32, i32
  }
  func.func @transform_2(%arg0: i32, %arg1: i32) -> (i32, i32, i32, i32) {
    %c0_i32 = arith.constant 0 : i32
    %c0_i32_0 = arith.constant 0 : i32
    %c0_i32_1 = arith.constant 0 : i32
    %c0_i32_2 = arith.constant 0 : i32
    return %arg1, %c0_i32, %c0_i32_0, %c0_i32_1 : i32, i32, i32, i32
  }
  func.func @transform_3(%arg0: i32, %arg1: i32) -> (i32, i32) {
    %c0_i32 = arith.constant 0 : i32
    %c0_i32_0 = arith.constant 0 : i32
    %c0_i32_1 = arith.constant 0 : i32
    return %c0_i32, %c0_i32_0 : i32, i32
  }
  func.func @transform_4(%arg0: i32, %arg1: i32) -> (i32, i32, i32) {
    %c0_i32 = arith.constant 0 : i32
    %c0_i32_0 = arith.constant 0 : i32
    %c0_i32_1 = arith.constant 0 : i32
    %c0_i32_2 = arith.constant 0 : i32
    return %c0_i32, %c0_i32_0, %c0_i32_1 : i32, i32, i32
  }
  func.func @transform_5(%arg0: i32, %arg1: i32) -> (i32, i32, i32, i32) {
    %c0_i32 = arith.constant 0 : i32
    %c0_i32_0 = arith.constant 0 : i32
    %c0_i32_1 = arith.constant 0 : i32
    %c0_i32_2 = arith.constant 0 : i32
    %c0_i32_3 = arith.constant 0 : i32
    return %c0_i32, %c0_i32_0, %c0_i32_1, %c0_i32_2 : i32, i32, i32, i32
  }
  func.func @transform_6(%arg0: i32, %arg1: i32) -> (i32, i32, i32) {
    %c0_i32 = arith.constant 0 : i32
    %c0_i32_0 = arith.constant 0 : i32
    %c0_i32_1 = arith.constant 0 : i32
    %c0_i32_2 = arith.constant 0 : i32
    return %c0_i32, %c0_i32_0, %c0_i32_1 : i32, i32, i32
  }
  func.func @transform_7(%arg0: i32, %arg1: i32) -> (i32, i32, i32) {
    %c0_i32 = arith.constant 0 : i32
    %c0_i32_0 = arith.constant 0 : i32
    return %arg0, %arg1, %c0_i32 : i32, i32, i32
  }
}

</mosaic_0001>

<llo_original>
// kernel: dsmnet_forward.1
$region0: #{dsmnet_forward.1}
  #allocation0 [shape = 'u32[]', space=smem, size = 0x4, offset = 0x4, fixed_abs, tag = 'smem constant byte address 0x4 - core index']
  #allocation1 [shape = 'u32[144,128]{1,0:T(1,128)}', space=vmem, size = 0x12000, scoped, tag = 'internal scratch']
  %s0 = inlined_call_operand.vmem [shape: f32[2,16,16], index: 0, kind: input, shape index: {}]
  %s1 = inlined_call_operand.vmem [shape: f32[2,18,18], index: 1, kind: input, shape index: {}]
  %s2 = inlined_call_operand.vmem [shape: f32[2,2,8,16], index: 2, kind: input, shape index: {}]
  %s3 = inlined_call_operand.vmem [shape: f32[16,32], index: 3, kind: input, shape index: {}]
  %s4 = inlined_call_operand.vmem [shape: f32[2,16,32], index: 4, kind: input, shape index: {}]
  %s5 = inlined_call_operand.vmem [shape: f32[9,4,1,1], index: 5, kind: input, shape index: {}]
  %s6 = inlined_call_operand.vmem [shape: f32[2,1,32], index: 6, kind: input, shape index: {}]
  %s7 = inlined_call_operand.vmem [shape: f32[2,16,64], index: 7, kind: output, shape index: {}]
  %s8 = sld [smem:[#allocation0]]
  $region61: #{dsmnet_forward.1} parent=0
    _
  %s10 = ssub.s32 1, %s8
  %s11 = scalar_select 0, %s10, %s8
  loop: start=0, step=1, limit=6
  $region2: #{dsmnet_forward.1} parent=0 // loop_pre_header
    _
  $region3: #{dsmnet_forward.1} parent=0 // loop_header
    %s13 = sphi 0, %s17
    %p14 = scmp.ge.s32.totalorder %s13, 6
    %s20 = sphi 0, %s32
    %s21 = sphi 0, %s28
    %s22 = sphi 0, %s20
    %s23 = sphi 0, %s21
    %s24 = sphi 0, %s22
    %s25 = sphi 0, %s23
    %s35 = sphi 0, %s37
    %s38 = sphi 0, %s35
    %s39 = sphi 0, %s38
    %s55 = sphi 0, %s39
    %s61 = sphi 0, %s63
    %s64 = sphi 0, %s61
    %s65 = sphi 0, %s64
    %s81 = sphi 0, %s65
    %s87 = sphi 0, %s89
    %s90 = sphi 0, %s87
    %s91 = sphi 0, %s90
    %s107 = sphi 0, %s91
    %s111 = sphi 0, %s111
    %s113 = sphi 0, %s111
    %s114 = sphi 0, %s113
    %s128 = sphi 0, %s114
    %s132 = sphi 0, %s132
    %s134 = sphi 0, %s132
    %s135 = sphi 0, %s134
    %s149 = sphi 0, %s135
    %s153 = sphi 0, %s153
    %s155 = sphi 0, %s153
    %s156 = sphi 0, %s155
    %s170 = sphi 0, %s156
    %s174 = sphi 0, %s174
    %s176 = sphi 0, %s174
    %s177 = sphi 0, %s176
    %s191 = sphi 0, %s177
    %s199 = sphi 0, %s201
    %s202 = sphi 0, %s199
    %s203 = sphi 0, %s202
    %s219 = sphi 0, %s203
  $region4: #{dsmnet_forward.1} parent=0 // loop_header_branch
    %16 = sbr.rel (%p14) target = $region8
  $region5: #{dsmnet_forward.1} parent=0 // loop_body
    %s18 = ssub.s32 %s13, 1
    %s19 = ssub.s32 %s13, 2
    %s26 = sadd.s32 1, %s21
    %p27 = scmp.ge.s32.totalorder %s26, 2
    %s28 = scalar_select %p27, 0, %s26
    %s29 = sadd.s32 1, %s20
    %s30 = scalar_select %p27, %s29, %s20
    %p31 = scmp.ge.s32.totalorder %s30, 2
    %s32 = scalar_select %p31, 0, %s30
    %s33 = ssub.s32 %s20, %s32
    %p34 = scmp.eq.s32.totalorder %s33, 0
    %s36 = sadd.s32 %s35, 1
    %s37 = scalar_select %p34, %s35, %s36
    %p40 = pneg %p34
    %p41 = scmp.eq.s32.totalorder %s13, 3
    %p42 = por %p40, %p41
    %p43 = scmp.ne.s32.totalorder %s35, %s38
    %p44 = scmp.eq.s32.totalorder %s13, 0
    %p45 = por %p43, %p44
    %p46 = scmp.ne.s32.totalorder %s35, %s38
    %p47 = scmp.eq.s32.totalorder %s18, 3
    %p48 = por %p46, %p47
    %p49 = scmp.ne.s32.totalorder %s38, %s39
    %p50 = scmp.eq.s32.totalorder %s18, 0
    %p51 = por %p49, %p50
    %p52 = scmp.ne.s32.totalorder %s38, %s39
    %p53 = scmp.eq.s32.totalorder %s19, 3
    %p54 = por %p52, %p53
    %p56 = scmp.ne.s32.totalorder %s39, %s55
    %p57 = scmp.eq.s32.totalorder %s19, 0
    %p58 = por %p56, %p57
    %s59 = ssub.s32 %s20, %s32
    %p60 = scmp.eq.s32.totalorder %s59, 0
    %s62 = sadd.s32 %s61, 1
    %s63 = scalar_select %p60, %s61, %s62
    %p66 = pneg %p60
    %p67 = scmp.eq.s32.totalorder %s13, 3
    %p68 = por %p66, %p67
    %p69 = scmp.ne.s32.totalorder %s61, %s64
    %p70 = scmp.eq.s32.totalorder %s13, 0
    %p71 = por %p69, %p70
    %p72 = scmp.ne.s32.totalorder %s61, %s64
    %p73 = scmp.eq.s32.totalorder %s18, 3
    %p74 = por %p72, %p73
    %p75 = scmp.ne.s32.totalorder %s64, %s65
    %p76 = scmp.eq.s32.totalorder %s18, 0
    %p77 = por %p75, %p76
    %p78 = scmp.ne.s32.totalorder %s64, %s65
    %p79 = scmp.eq.s32.totalorder %s19, 3
    %p80 = por %p78, %p79
    %p82 = scmp.ne.s32.totalorder %s65, %s81
    %p83 = scmp.eq.s32.totalorder %s19, 0
    %p84 = por %p82, %p83
    %s85 = ssub.s32 %s21, %s28
    %p86 = scmp.eq.s32.totalorder %s85, 0
    %s88 = sadd.s32 %s87, 1
    %s89 = scalar_select %p86, %s87, %s88
    %p92 = pneg %p86
    %p93 = scmp.eq.s32.totalorder %s13, 3
    %p94 = por %p92, %p93
    %p95 = scmp.ne.s32.totalorder %s87, %s90
    %p96 = scmp.eq.s32.totalorder %s13, 0
    %p97 = por %p95, %p96
    %p98 = scmp.ne.s32.totalorder %s87, %s90
    %p99 = scmp.eq.s32.totalorder %s18, 3
    %p100 = por %p98, %p99
    %p101 = scmp.ne.s32.totalorder %s90, %s91
    %p102 = scmp.eq.s32.totalorder %s18, 0
    %p103 = por %p101, %p102
    %p104 = scmp.ne.s32.totalorder %s90, %s91
    %p105 = scmp.eq.s32.totalorder %s19, 3
    %p106 = por %p104, %p105
    %p108 = scmp.ne.s32.totalorder %s91, %s107
    %p109 = scmp.eq.s32.totalorder %s19, 0
    %p110 = por %p108, %p109
    %s112 = sadd.s32 %s111, 1
    %p115 = scmp.eq.s32.totalorder %s13, 3
    %p116 = scmp.ne.s32.totalorder %s111, %s113
    %p117 = scmp.eq.s32.totalorder %s13, 0
    %p118 = por %p116, %p117
    %p119 = scmp.ne.s32.totalorder %s111, %s113
    %p120 = scmp.eq.s32.totalorder %s18, 3
    %p121 = por %p119, %p120
    %p122 = scmp.ne.s32.totalorder %s113, %s114
    %p123 = scmp.eq.s32.totalorder %s18, 0
    %p124 = por %p122, %p123
    %p125 = scmp.ne.s32.totalorder %s113, %s114
    %p126 = scmp.eq.s32.totalorder %s19, 3
    %p127 = por %p125, %p126
    %p129 = scmp.ne.s32.totalorder %s114, %s128
    %p130 = scmp.eq.s32.totalorder %s19, 0
    %p131 = por %p129, %p130
    %s133 = sadd.s32 %s132, 1
    %p136 = scmp.eq.s32.totalorder %s13, 3
    %p137 = scmp.ne.s32.totalorder %s132, %s134
    %p138 = scmp.eq.s32.totalorder %s13, 0
    %p139 = por %p137, %p138
    %p140 = scmp.ne.s32.totalorder %s132, %s134
    %p141 = scmp.eq.s32.totalorder %s18, 3
    %p142 = por %p140, %p141
    %p143 = scmp.ne.s32.totalorder %s134, %s135
    %p144 = scmp.eq.s32.totalorder %s18, 0
    %p145 = por %p143, %p144
    %p146 = scmp.ne.s32.totalorder %s134, %s135
    %p147 = scmp.eq.s32.totalorder %s19, 3
    %p148 = por %p146, %p147
    %p150 = scmp.ne.s32.totalorder %s135, %s149
    %p151 = scmp.eq.s32.totalorder %s19, 0
    %p152 = por %p150, %p151
    %s154 = sadd.s32 %s153, 1
    %p157 = scmp.eq.s32.totalorder %s13, 3
    %p158 = scmp.ne.s32.totalorder %s153, %s155
    %p159 = scmp.eq.s32.totalorder %s13, 0
    %p160 = por %p158, %p159
    %p161 = scmp.ne.s32.totalorder %s153, %s155
    %p162 = scmp.eq.s32.totalorder %s18, 3
    %p163 = por %p161, %p162
    %p164 = scmp.ne.s32.totalorder %s155, %s156
    %p165 = scmp.eq.s32.totalorder %s18, 0
    %p166 = por %p164, %p165
    %p167 = scmp.ne.s32.totalorder %s155, %s156
    %p168 = scmp.eq.s32.totalorder %s19, 3
    %p169 = por %p167, %p168
    %p171 = scmp.ne.s32.totalorder %s156, %s170
    %p172 = scmp.eq.s32.totalorder %s19, 0
    %p173 = por %p171, %p172
    %s175 = sadd.s32 %s174, 1
    %p178 = scmp.eq.s32.totalorder %s13, 3
    %p179 = scmp.ne.s32.totalorder %s174, %s176
    %p180 = scmp.eq.s32.totalorder %s13, 0
    %p181 = por %p179, %p180
    %p182 = scmp.ne.s32.totalorder %s174, %s176
    %p183 = scmp.eq.s32.totalorder %s18, 3
    %p184 = por %p182, %p183
    %p185 = scmp.ne.s32.totalorder %s176, %s177
    %p186 = scmp.eq.s32.totalorder %s18, 0
    %p187 = por %p185, %p186
    %p188 = scmp.ne.s32.totalorder %s176, %s177
    %p189 = scmp.eq.s32.totalorder %s19, 3
    %p190 = por %p188, %p189
    %p192 = scmp.ne.s32.totalorder %s177, %s191
    %p193 = scmp.eq.s32.totalorder %s19, 0
    %p194 = por %p192, %p193
    %s195 = ssub.s32 %s20, %s32
    %s196 = ssub.s32 %s21, %s28
    %s197 = sor.u32 %s195, %s196
    %p198 = scmp.eq.s32.totalorder %s197, 0
    %s200 = sadd.s32 %s199, 1
    %s201 = scalar_select %p198, %s199, %s200
    %p204 = pneg %p198
    %p205 = scmp.eq.s32.totalorder %s13, 3
    %p206 = por %p204, %p205
    %p207 = scmp.ne.s32.totalorder %s199, %s202
    %p208 = scmp.eq.s32.totalorder %s13, 0
    %p209 = por %p207, %p208
    %p210 = scmp.ne.s32.totalorder %s199, %s202
    %p211 = scmp.eq.s32.totalorder %s18, 3
    %p212 = por %p210, %p211
    %p213 = scmp.ne.s32.totalorder %s202, %s203
    %p214 = scmp.eq.s32.totalorder %s18, 0
    %p215 = por %p213, %p214
    %p216 = scmp.ne.s32.totalorder %s202, %s203
    %p217 = scmp.eq.s32.totalorder %s19, 3
    %p218 = por %p216, %p217
    %p220 = scmp.ne.s32.totalorder %s203, %s219
    %p221 = scmp.eq.s32.totalorder %s19, 0
    %p222 = por %p220, %p221
    %p223 = scmp.le.s32.totalorder 1, %s13
    %p224 = scmp.lt.s32.totalorder %s13, 5
    %p225 = pnand %p223, %p224
    %p226 = pneg %p225
    // Predicated region
    $region9: #{dsmnet_forward.1} parent=5 // pred_check
      _
    $region10: #{dsmnet_forward.1} parent=5 // pred_check_branch
      %228 = sbr.rel (%p225) target = $region12
    $region11: #{dsmnet_forward.1} parent=5 // pred_region
      %s229 = ssub.s32 %s13, 1
      // Predicated region
      $region13: #{dsmnet_forward.1} parent=11 // pred_check
        %p230 = pneg %p124
      $region14: #{dsmnet_forward.1} parent=11 // pred_check_branch
        %232 = sbr.rel (%p230) target = $region16
      $region15: #{dsmnet_forward.1} parent=11 // pred_region
        _
      $region16: #{dsmnet_forward.1} parent=11 // pred_fallthru
        _
      // Predicated region
      $region17: #{dsmnet_forward.1} parent=11 // pred_check
        %p233 = pneg %p145
      $region18: #{dsmnet_forward.1} parent=11 // pred_check_branch
        %235 = sbr.rel (%p233) target = $region20
      $region19: #{dsmnet_forward.1} parent=11 // pred_region
        _
      $region20: #{dsmnet_forward.1} parent=11 // pred_fallthru
        _
      // Predicated region
      $region21: #{dsmnet_forward.1} parent=11 // pred_check
        %p236 = pneg %p166
      $region22: #{dsmnet_forward.1} parent=11 // pred_check_branch
        %238 = sbr.rel (%p236) target = $region24
      $region23: #{dsmnet_forward.1} parent=11 // pred_region
        _
      $region24: #{dsmnet_forward.1} parent=11 // pred_fallthru
        _
      // Predicated region
      $region25: #{dsmnet_forward.1} parent=11 // pred_check
        %p239 = pneg %p187
      $region26: #{dsmnet_forward.1} parent=11 // pred_check_branch
        %241 = sbr.rel (%p239) target = $region28
      $region27: #{dsmnet_forward.1} parent=11 // pred_region
        _
      $region28: #{dsmnet_forward.1} parent=11 // pred_fallthru
        _
    $region12: #{dsmnet_forward.1} parent=5 // pred_fallthru
      _
    %p242 = scmp.lt.s32.totalorder %s13, 4
    // Predicated region
    $region29: #{dsmnet_forward.1} parent=5 // pred_check
      %p243 = pneg %p242
    $region30: #{dsmnet_forward.1} parent=5 // pred_check_branch
      %245 = sbr.rel (%p243) target = $region32
    $region31: #{dsmnet_forward.1} parent=5 // pred_region
      // Predicated region
      $region33: #{dsmnet_forward.1} parent=31 // pred_check
        %p246 = pneg %p45
      $region34: #{dsmnet_forward.1} parent=31 // pred_check_branch
        %248 = sbr.rel (%p246) target = $region36
      $region35: #{dsmnet_forward.1} parent=31 // pred_region
        %p249 = scmp.lt.s32.totalorder %s20, 1
        %s250 = scalar_select %p249, %s20, 1
        %s251 = smul.addr %s250, 2
        %s252 = smul.addr %s251, 8
        %s253 = scalar_lea.vmem %s0, %s252
      $region36: #{dsmnet_forward.1} parent=31 // pred_fallthru
        _
      // Predicated region
      $region37: #{dsmnet_forward.1} parent=31 // pred_check
        %p254 = pneg %p71
      $region38: #{dsmnet_forward.1} parent=31 // pred_check_branch
        %256 = sbr.rel (%p254) target = $region40
      $region39: #{dsmnet_forward.1} parent=31 // pred_region
        %p257 = scmp.lt.s32.totalorder %s20, 1
        %s258 = scalar_select %p257, %s20, 1
        %s259 = smul.addr %s258, 3
        %s260 = smul.addr %s259, 8
        %s261 = scalar_lea.vmem %s1, %s260
      $region40: #{dsmnet_forward.1} parent=31 // pred_fallthru
        _
      // Predicated region
      $region41: #{dsmnet_forward.1} parent=31 // pred_check
        %p262 = pneg %p97
      $region42: #{dsmnet_forward.1} parent=31 // pred_check_branch
        %264 = sbr.rel (%p262) target = $region44
      $region43: #{dsmnet_forward.1} parent=31 // pred_region
        %p265 = scmp.lt.s32.totalorder %s21, 1
        %s266 = scalar_select %p265, %s21, 1
        %s267 = smul.addr %s266, 2
        %s268 = smul.addr %s267, 8
        %s269 = scalar_lea.vmem %s2, %s268
      $region44: #{dsmnet_forward.1} parent=31 // pred_fallthru
        _
    $region32: #{dsmnet_forward.1} parent=5 // pred_fallthru
      _
    %p270 = scmp.le.s32.totalorder 1, %s13
    %p271 = scmp.lt.s32.totalorder %s13, 5
    %p272 = pnand %p270, %p271
    %p273 = pneg %p272
    // Predicated region
    $region45: #{dsmnet_forward.1} parent=5 // pred_check
      _
    $region46: #{dsmnet_forward.1} parent=5 // pred_check_branch
      %275 = sbr.rel (%p272) target = $region48
    $region47: #{dsmnet_forward.1} parent=5 // pred_region
      %s276 = ssub.s32 %s13, 1
      %p277 = scmp.lt.s32.totalorder %s22, 1
      %s278 = scalar_select %p277, %s22, 1
      %s279 = smul.addr %s278, 2
      %s280 = smul.addr %s279, 8
      %s281 = scalar_lea.vmem %s0, %s280
      %p282 = pneg %p51
      %p283 = pneg %p48
      %p284 = scmp.lt.s32.totalorder %s22, 1
      %s285 = scalar_select %p284, %s22, 1
      %s286 = smul.addr %s285, 3
      %s287 = smul.addr %s286, 8
      %s288 = scalar_lea.vmem %s1, %s287
      %p289 = pneg %p77
      %p290 = pneg %p74
      %p291 = scmp.lt.s32.totalorder %s23, 1
      %s292 = scalar_select %p291, %s23, 1
      %s293 = smul.addr %s292, 2
      %s294 = smul.addr %s293, 8
      %s295 = scalar_lea.vmem %s2, %s294
      %p296 = pneg %p103
      %p297 = pneg %p100
      %p298 = pneg %p124
      %p299 = pneg %p121
      %p300 = pneg %p145
      %p301 = pneg %p142
      %p302 = pneg %p166
      %p303 = pneg %p163
      %p304 = pneg %p187
      %p305 = pneg %p184
      %p306 = pneg %p215
      %p307 = pneg %p212
      %p308 = scmp.lt.s32.totalorder %s22, 1
      %s309 = scalar_select %p308, %s22, 1
      %p310 = scmp.lt.s32.totalorder %s23, 1
      %s311 = scalar_select %p310, %s23, 1
      %s312 = smul.addr %s309, 2
      %s313 = sadd.s32 %s311, %s312
      %s314 = smul.addr %s313, 8
      %s315 = scalar_lea.vmem %s7, %s314
      %p316 = scmp.lt.s32.totalorder %s22, 1
      %s317 = scalar_select %p316, %s22, 1
      %s318 = smul.addr %s317, 2
      %s319 = smul.addr %s318, 8
      %s320 = scalar_lea.vmem %s0, %s319
      %p321 = scmp.lt.s32.totalorder %s22, 1
      %s322 = scalar_select %p321, %s22, 1
      %s323 = smul.addr %s322, 3
      %s324 = smul.addr %s323, 8
      %s325 = scalar_lea.vmem %s1, %s324
      %p326 = scmp.lt.s32.totalorder %s23, 1
      %s327 = scalar_select %p326, %s23, 1
      %s328 = smul.addr %s327, 2
      %s329 = smul.addr %s328, 8
      %s330 = scalar_lea.vmem %s2, %s329
      %p331 = scmp.lt.s32.totalorder %s22, 1
      %s332 = scalar_select %p331, %s22, 1
      %p333 = scmp.lt.s32.totalorder %s23, 1
      %s334 = scalar_select %p333, %s23, 1
      %s335 = smul.addr %s332, 2
      %s336 = sadd.s32 %s334, %s335
      %s337 = smul.addr %s336, 8
      %s338 = scalar_lea.vmem %s7, %s337
      %v339 = vld [vmem:[%s320] sm:$0xff]
      %v340 = vld [vmem:[%s320 + $0x8] sm:$0xff]
      %v341 = vlaneseq
      %v342 = vshrl.u32 %v341, 7
      %v343 = vlaneseq
      %v344 = vand.u32 %v343, 127
      %vm345 = vcmp.lt.s32.totalorder %v344, 0
      %v346 = vsub.s32 0, %v344
      %v347 = vsel %vm345, %v346, %v344
      %v348 = vshrl.u32 %v347, 3
      %v349 = vand.u32 %v347, 7
      %v350 = vsub.s32 0, %v349
      %v351 = vsel %vm345, %v350, %v349
      %vm352 = vcmp.ne.s32.totalorder %v351, 0
      %vm353 = vcmp.lt.s32.totalorder %v351, 0
      %vm354 = vmand %vm353, %vm352
      %v355 = vadd.s32 %v351, 8
      %v356 = vsel %vm354, %v355, %v351
      %s357 = smul.u32 %s23, 8
      %s358 = sadd.s32 %s357, 1
      %s359 = scalar_lea.vmem %s325, %s357
      %v360 = vld [vmem:[%s359] sm:$0xff]
      %vm361 = vcmp.ge.s32.totalorder %v342, 1
      %vm362 = vcmp.ge.s32.totalorder %v356, 1
      %vm363 = vmand %vm361, %vm362
      %v364 = vsel %vm363, %v360, 0.0
      %v365 = vld [vmem:[%s5] sm:$0x1]
      %v367 = vlaneseq
      %v368 = vshrl.u32 %v367, 7
      %v369 = vsub.s32 0, %v368
      %v370 = vrot.slane %v365, %v369
      %371 = vset.pattern.permute.xlu0 0
      %372 = vperm.xlu0 %371, %v370
      %v373 = vpop.permute.xlu0 %372
      %v375 = vmul.f32 %v364, %v373
      %v376 = vadd.f32 %v375, 0.0
      %s377 = scalar_lea.vmem %s5, 1
      %v378 = vld [vmem:[%s377] sm:$0x1]
      %v380 = vlaneseq
      %v381 = vshrl.u32 %v380, 7
      %v382 = vsub.s32 0, %v381
      %v383 = vrot.slane %v378, %v382
      %384 = vset.pattern.permute.xlu0 0
      %385 = vperm.xlu0 %384, %v383
      %v386 = vpop.permute.xlu0 %385
      %v388 = vmul.f32 %v364, %v386
      %v389 = vadd.f32 %v388, 0.0
      %s390 = scalar_lea.vmem %s5, 2
      %v391 = vld [vmem:[%s390] sm:$0x1]
      %v393 = vlaneseq
      %v394 = vshrl.u32 %v393, 7
      %v395 = vsub.s32 0, %v394
      %v396 = vrot.slane %v391, %v395
      %397 = vset.pattern.permute.xlu0 0
      %398 = vperm.xlu0 %397, %v396
      %v399 = vpop.permute.xlu0 %398
      %v401 = vmul.f32 %v364, %v399
      %v402 = vadd.f32 %v401, 0.0
      %s403 = scalar_lea.vmem %s5, 3
      %v404 = vld [vmem:[%s403] sm:$0x1]
      %v406 = vlaneseq
      %v407 = vshrl.u32 %v406, 7
      %v408 = vsub.s32 0, %v407
      %v409 = vrot.slane %v404, %v408
      %410 = vset.pattern.permute.xlu0 0
      %411 = vperm.xlu0 %410, %v409
      %v412 = vpop.permute.xlu0 %411
      %v414 = vmul.f32 %v364, %v412
      %v415 = vadd.f32 %v414, 0.0
      %v416 = vsel %vm361, %v360, 0.0
      %s417 = scalar_lea.vmem %s5, 4
      %v418 = vld [vmem:[%s417] sm:$0x1]
      %v420 = vlaneseq
      %v421 = vshrl.u32 %v420, 7
      %v422 = vsub.s32 0, %v421
      %v423 = vrot.slane %v418, %v422
      %424 = vset.pattern.permute.xlu0 0
      %425 = vperm.xlu0 %424, %v423
      %v426 = vpop.permute.xlu0 %425
      %v428 = vmul.f32 %v416, %v426
      %430 = vrot.lane.b32.xlu0 %v428, 127
      %v431 = vpop.permute.xlu0 %430
      %v433 = vadd.f32 %v376, %v431
      %s434 = scalar_lea.vmem %s5, 5
      %v435 = vld [vmem:[%s434] sm:$0x1]
      %v437 = vlaneseq
      %v438 = vshrl.u32 %v437, 7
      %v439 = vsub.s32 0, %v438
      %v440 = vrot.slane %v435, %v439
      %441 = vset.pattern.permute.xlu0 0
      %442 = vperm.xlu0 %441, %v440
      %v443 = vpop.permute.xlu0 %442
      %v445 = vmul.f32 %v416, %v443
      %447 = vrot.lane.b32.xlu0 %v445, 127
      %v448 = vpop.permute.xlu0 %447
      %v450 = vadd.f32 %v389, %v448
      %s451 = scalar_lea.vmem %s5, 6
      %v452 = vld [vmem:[%s451] sm:$0x1]
      %v454 = vlaneseq
      %v455 = vshrl.u32 %v454, 7
      %v456 = vsub.s32 0, %v455
      %v457 = vrot.slane %v452, %v456
      %458 = vset.pattern.permute.xlu0 0
      %459 = vperm.xlu0 %458, %v457
      %v460 = vpop.permute.xlu0 %459
      %v462 = vmul.f32 %v416, %v460
      %464 = vrot.lane.b32.xlu0 %v462, 127
      %v465 = vpop.permute.xlu0 %464
      %v467 = vadd.f32 %v402, %v465
      %s468 = scalar_lea.vmem %s5, 7
      %v469 = vld [vmem:[%s468] sm:$0x1]
      %v471 = vlaneseq
      %v472 = vshrl.u32 %v471, 7
      %v473 = vsub.s32 0, %v472
      %v474 = vrot.slane %v469, %v473
      %475 = vset.pattern.permute.xlu0 0
      %476 = vperm.xlu0 %475, %v474
      %v477 = vpop.permute.xlu0 %476
      %v479 = vmul.f32 %v416, %v477
      %481 = vrot.lane.b32.xlu0 %v479, 127
      %v482 = vpop.permute.xlu0 %481
      %v484 = vadd.f32 %v415, %v482
      %vm485 = vcmp.le.s32.totalorder %v356, 6
      %vm486 = vmand %vm361, %vm485
      %488 = vrot.lane.b32.xlu0 %v360, 126
      %v489 = vpop.permute.xlu0 %488
      %v491 = vsel %vm486, %v489, 0.0
      %s492 = scalar_lea.vmem %s5, 8
      %v493 = vld [vmem:[%s492] sm:$0x1]
      %v495 = vlaneseq
      %v496 = vshrl.u32 %v495, 7
      %v497 = vsub.s32 0, %v496
      %v498 = vrot.slane %v493, %v497
      %499 = vset.pattern.permute.xlu0 0
      %500 = vperm.xlu0 %499, %v498
      %v501 = vpop.permute.xlu0 %500
      %v503 = vmul.f32 %v491, %v501
      %v504 = vadd.f32 %v433, %v503
      %s505 = scalar_lea.vmem %s5, 9
      %v506 = vld [vmem:[%s505] sm:$0x1]
      %v508 = vlaneseq
      %v509 = vshrl.u32 %v508, 7
      %v510 = vsub.s32 0, %v509
      %v511 = vrot.slane %v506, %v510
      %512 = vset.pattern.permute.xlu0 0
      %513 = vperm.xlu0 %512, %v511
      %v514 = vpop.permute.xlu0 %513
      %v516 = vmul.f32 %v491, %v514
      %v517 = vadd.f32 %v450, %v516
      %s518 = scalar_lea.vmem %s5, 10
      %v519 = vld [vmem:[%s518] sm:$0x1]
      %v521 = vlaneseq
      %v522 = vshrl.u32 %v521, 7
      %v523 = vsub.s32 0, %v522
      %v524 = vrot.slane %v519, %v523
      %525 = vset.pattern.permute.xlu0 0
      %526 = vperm.xlu0 %525, %v524
      %v527 = vpop.permute.xlu0 %526
      %v529 = vmul.f32 %v491, %v527
      %v530 = vadd.f32 %v467, %v529
      %s531 = scalar_lea.vmem %s5, 11
      %v532 = vld [vmem:[%s531] sm:$0x1]
      %v534 = vlaneseq
      %v535 = vshrl.u32 %v534, 7
      %v536 = vsub.s32 0, %v535
      %v537 = vrot.slane %v532, %v536
      %538 = vset.pattern.permute.xlu0 0
      %539 = vperm.xlu0 %538, %v537
      %v540 = vpop.permute.xlu0 %539
      %v542 = vmul.f32 %v491, %v540
      %v543 = vadd.f32 %v484, %v542
      %s544 = scalar_lea.vmem %s325, %s358
      %v545 = vld [vmem:[%s544] sm:$0xff]
      %v546 = vsel %vm362, %v545, 0.0
      %s547 = scalar_lea.vmem %s5, 12
      %v548 = vld [vmem:[%s547] sm:$0x1]
      %v550 = vlaneseq
      %v551 = vshrl.u32 %v550, 7
      %v552 = vsub.s32 0, %v551
      %v553 = vrot.slane %v548, %v552
      %554 = vset.pattern.permute.xlu0 0
      %555 = vperm.xlu0 %554, %v553
      %v556 = vpop.permute.xlu0 %555
      %v558 = vmul.f32 %v546, %v556
      %v559 = vadd.f32 %v504, %v558
      %s560 = scalar_lea.vmem %s5, 13
      %v561 = vld [vmem:[%s560] sm:$0x1]
      %v563 = vlaneseq
      %v564 = vshrl.u32 %v563, 7
      %v565 = vsub.s32 0, %v564
      %v566 = vrot.slane %v561, %v565
      %567 = vset.pattern.permute.xlu0 0
      %568 = vperm.xlu0 %567, %v566
      %v569 = vpop.permute.xlu0 %568
      %v571 = vmul.f32 %v546, %v569
      %v572 = vadd.f32 %v517, %v571
      %s573 = scalar_lea.vmem %s5, 14
      %v574 = vld [vmem:[%s573] sm:$0x1]
      %v576 = vlaneseq
      %v577 = vshrl.u32 %v576, 7
      %v578 = vsub.s32 0, %v577
      %v579 = vrot.slane %v574, %v578
      %580 = vset.pattern.permute.xlu0 0
      %581 = vperm.xlu0 %580, %v579
      %v582 = vpop.permute.xlu0 %581
      %v584 = vmul.f32 %v546, %v582
      %v585 = vadd.f32 %v530, %v584
      %s586 = scalar_lea.vmem %s5, 15
      %v587 = vld [vmem:[%s586] sm:$0x1]
      %v589 = vlaneseq
      %v590 = vshrl.u32 %v589, 7
      %v591 = vsub.s32 0, %v590
      %v592 = vrot.slane %v587, %v591
      %593 = vset.pattern.permute.xlu0 0
      %594 = vperm.xlu0 %593, %v592
      %v595 = vpop.permute.xlu0 %594
      %v597 = vmul.f32 %v546, %v595
      %v598 = vadd.f32 %v543, %v597
      %s599 = scalar_lea.vmem %s5, 16
      %v600 = vld [vmem:[%s599] sm:$0x1]
      %v602 = vlaneseq
      %v603 = vshrl.u32 %v602, 7
      %v604 = vsub.s32 0, %v603
      %v605 = vrot.slane %v600, %v604
      %606 = vset.pattern.permute.xlu0 0
      %607 = vperm.xlu0 %606, %v605
      %v608 = vpop.permute.xlu0 %607
      %v610 = vmul.f32 %v545, %v608
      %612 = vrot.lane.b32.xlu0 %v610, 127
      %v613 = vpop.permute.xlu0 %612
      %v615 = vadd.f32 %v559, %v613
      %s616 = scalar_lea.vmem %s5, 17
      %v617 = vld [vmem:[%s616] sm:$0x1]
      %v619 = vlaneseq
      %v620 = vshrl.u32 %v619, 7
      %v621 = vsub.s32 0, %v620
      %v622 = vrot.slane %v617, %v621
      %623 = vset.pattern.permute.xlu0 0
      %624 = vperm.xlu0 %623, %v622
      %v625 = vpop.permute.xlu0 %624
      %v627 = vmul.f32 %v545, %v625
      %629 = vrot.lane.b32.xlu0 %v627, 127
      %v630 = vpop.permute.xlu0 %629
      %v632 = vadd.f32 %v572, %v630
      %s633 = scalar_lea.vmem %s5, 18
      %v634 = vld [vmem:[%s633] sm:$0x1]
      %v636 = vlaneseq
      %v637 = vshrl.u32 %v636, 7
      %v638 = vsub.s32 0, %v637
      %v639 = vrot.slane %v634, %v638
      %640 = vset.pattern.permute.xlu0 0
      %641 = vperm.xlu0 %640, %v639
      %v642 = vpop.permute.xlu0 %641
      %v644 = vmul.f32 %v545, %v642
      %646 = vrot.lane.b32.xlu0 %v644, 127
      %v647 = vpop.permute.xlu0 %646
      %v649 = vadd.f32 %v585, %v647
      %s650 = scalar_lea.vmem %s5, 19
      %v651 = vld [vmem:[%s650] sm:$0x1]
      %v653 = vlaneseq
      %v654 = vshrl.u32 %v653, 7
      %v655 = vsub.s32 0, %v654
      %v656 = vrot.slane %v651, %v655
      %657 = vset.pattern.permute.xlu0 0
      %658 = vperm.xlu0 %657, %v656
      %v659 = vpop.permute.xlu0 %658
      %v661 = vmul.f32 %v545, %v659
      %663 = vrot.lane.b32.xlu0 %v661, 127
      %v664 = vpop.permute.xlu0 %663
      %v666 = vadd.f32 %v598, %v664
      %668 = vrot.lane.b32.xlu0 %v545, 126
      %v669 = vpop.permute.xlu0 %668
      %v671 = vsel %vm485, %v669, 0.0
      %s672 = scalar_lea.vmem %s5, 20
      %v673 = vld [vmem:[%s672] sm:$0x1]
      %v675 = vlaneseq
      %v676 = vshrl.u32 %v675, 7
      %v677 = vsub.s32 0, %v676
      %v678 = vrot.slane %v673, %v677
      %679 = vset.pattern.permute.xlu0 0
      %680 = vperm.xlu0 %679, %v678
      %v681 = vpop.permute.xlu0 %680
      %v683 = vmul.f32 %v671, %v681
      %v684 = vadd.f32 %v615, %v683
      %s685 = scalar_lea.vmem %s5, 21
      %v686 = vld [vmem:[%s685] sm:$0x1]
      %v688 = vlaneseq
      %v689 = vshrl.u32 %v688, 7
      %v690 = vsub.s32 0, %v689
      %v691 = vrot.slane %v686, %v690
      %692 = vset.pattern.permute.xlu0 0
      %693 = vperm.xlu0 %692, %v691
      %v694 = vpop.permute.xlu0 %693
      %v696 = vmul.f32 %v671, %v694
      %v697 = vadd.f32 %v632, %v696
      %s698 = scalar_lea.vmem %s5, 22
      %v699 = vld [vmem:[%s698] sm:$0x1]
      %v701 = vlaneseq
      %v702 = vshrl.u32 %v701, 7
      %v703 = vsub.s32 0, %v702
      %v704 = vrot.slane %v699, %v703
      %705 = vset.pattern.permute.xlu0 0
      %706 = vperm.xlu0 %705, %v704
      %v707 = vpop.permute.xlu0 %706
      %v709 = vmul.f32 %v671, %v707
      %v710 = vadd.f32 %v649, %v709
      %s711 = scalar_lea.vmem %s5, 23
      %v712 = vld [vmem:[%s711] sm:$0x1]
      %v714 = vlaneseq
      %v715 = vshrl.u32 %v714, 7
      %v716 = vsub.s32 0, %v715
      %v717 = vrot.slane %v712, %v716
      %718 = vset.pattern.permute.xlu0 0
      %719 = vperm.xlu0 %718, %v717
      %v720 = vpop.permute.xlu0 %719
      %v722 = vmul.f32 %v671, %v720
      %v723 = vadd.f32 %v666, %v722
      %s724 = sadd.s32 %s357, 2
      %s725 = scalar_lea.vmem %s325, %s724
      %v726 = vld [vmem:[%s725] sm:$0xff]
      %vm727 = vcmp.le.s32.totalorder %v342, 6
      %vm728 = vmand %vm727, %vm362
      %v729 = vsel %vm728, %v726, 0.0
      %s730 = scalar_lea.vmem %s5, 24
      %v731 = vld [vmem:[%s730] sm:$0x1]
      %v733 = vlaneseq
      %v734 = vshrl.u32 %v733, 7
      %v735 = vsub.s32 0, %v734
      %v736 = vrot.slane %v731, %v735
      %737 = vset.pattern.permute.xlu0 0
      %738 = vperm.xlu0 %737, %v736
      %v739 = vpop.permute.xlu0 %738
      %v741 = vmul.f32 %v729, %v739
      %v742 = vadd.f32 %v684, %v741
      %s743 = scalar_lea.vmem %s5, 25
      %v744 = vld [vmem:[%s743] sm:$0x1]
      %v746 = vlaneseq
      %v747 = vshrl.u32 %v746, 7
      %v748 = vsub.s32 0, %v747
      %v749 = vrot.slane %v744, %v748
      %750 = vset.pattern.permute.xlu0 0
      %751 = vperm.xlu0 %750, %v749
      %v752 = vpop.permute.xlu0 %751
      %v754 = vmul.f32 %v729, %v752
      %v755 = vadd.f32 %v697, %v754
      %s756 = scalar_lea.vmem %s5, 26
      %v757 = vld [vmem:[%s756] sm:$0x1]
      %v759 = vlaneseq
      %v760 = vshrl.u32 %v759, 7
      %v761 = vsub.s32 0, %v760
      %v762 = vrot.slane %v757, %v761
      %763 = vset.pattern.permute.xlu0 0
      %764 = vperm.xlu0 %763, %v762
      %v765 = vpop.permute.xlu0 %764
      %v767 = vmul.f32 %v729, %v765
      %v768 = vadd.f32 %v710, %v767
      %s769 = scalar_lea.vmem %s5, 27
      %v770 = vld [vmem:[%s769] sm:$0x1]
      %v772 = vlaneseq
      %v773 = vshrl.u32 %v772, 7
      %v774 = vsub.s32 0, %v773
      %v775 = vrot.slane %v770, %v774
      %776 = vset.pattern.permute.xlu0 0
      %777 = vperm.xlu0 %776, %v775
      %v778 = vpop.permute.xlu0 %777
      %v780 = vmul.f32 %v729, %v778
      %v781 = vadd.f32 %v723, %v780
      %v782 = vsel %vm727, %v726, 0.0
      %s783 = scalar_lea.vmem %s5, 28
      %v784 = vld [vmem:[%s783] sm:$0x1]
      %v786 = vlaneseq
      %v787 = vshrl.u32 %v786, 7
      %v788 = vsub.s32 0, %v787
      %v789 = vrot.slane %v784, %v788
      %790 = vset.pattern.permute.xlu0 0
      %791 = vperm.xlu0 %790, %v789
      %v792 = vpop.permute.xlu0 %791
      %v794 = vmul.f32 %v782, %v792
      %796 = vrot.lane.b32.xlu0 %v794, 127
      %v797 = vpop.permute.xlu0 %796
      %v799 = vadd.f32 %v742, %v797
      %s800 = scalar_lea.vmem %s5, 29
      %v801 = vld [vmem:[%s800] sm:$0x1]
      %v803 = vlaneseq
      %v804 = vshrl.u32 %v803, 7
      %v805 = vsub.s32 0, %v804
      %v806 = vrot.slane %v801, %v805
      %807 = vset.pattern.permute.xlu0 0
      %808 = vperm.xlu0 %807, %v806
      %v809 = vpop.permute.xlu0 %808
      %v811 = vmul.f32 %v782, %v809
      %813 = vrot.lane.b32.xlu0 %v811, 127
      %v814 = vpop.permute.xlu0 %813
      %v816 = vadd.f32 %v755, %v814
      %s817 = scalar_lea.vmem %s5, 30
      %v818 = vld [vmem:[%s817] sm:$0x1]
      %v820 = vlaneseq
      %v821 = vshrl.u32 %v820, 7
      %v822 = vsub.s32 0, %v821
      %v823 = vrot.slane %v818, %v822
      %824 = vset.pattern.permute.xlu0 0
      %825 = vperm.xlu0 %824, %v823
      %v826 = vpop.permute.xlu0 %825
      %v828 = vmul.f32 %v782, %v826
      %830 = vrot.lane.b32.xlu0 %v828, 127
      %v831 = vpop.permute.xlu0 %830
      %v833 = vadd.f32 %v768, %v831
      %s834 = scalar_lea.vmem %s5, 31
      %v835 = vld [vmem:[%s834] sm:$0x1]
      %v837 = vlaneseq
      %v838 = vshrl.u32 %v837, 7
      %v839 = vsub.s32 0, %v838
      %v840 = vrot.slane %v835, %v839
      %841 = vset.pattern.permute.xlu0 0
      %842 = vperm.xlu0 %841, %v840
      %v843 = vpop.permute.xlu0 %842
      %v845 = vmul.f32 %v782, %v843
      %847 = vrot.lane.b32.xlu0 %v845, 127
      %v848 = vpop.permute.xlu0 %847
      %v850 = vadd.f32 %v781, %v848
      %vm851 = vmand %vm727, %vm485
      %853 = vrot.lane.b32.xlu0 %v726, 126
      %v854 = vpop.permute.xlu0 %853
      %v856 = vsel %vm851, %v854, 0.0
      %s857 = scalar_lea.vmem %s5, 32
      %v858 = vld [vmem:[%s857] sm:$0x1]
      %v860 = vlaneseq
      %v861 = vshrl.u32 %v860, 7
      %v862 = vsub.s32 0, %v861
      %v863 = vrot.slane %v858, %v862
      %864 = vset.pattern.permute.xlu0 0
      %865 = vperm.xlu0 %864, %v863
      %v866 = vpop.permute.xlu0 %865
      %v868 = vmul.f32 %v856, %v866
      %v869 = vadd.f32 %v799, %v868
      %s870 = scalar_lea.vmem %s5, 33
      %v871 = vld [vmem:[%s870] sm:$0x1]
      %v873 = vlaneseq
      %v874 = vshrl.u32 %v873, 7
      %v875 = vsub.s32 0, %v874
      %v876 = vrot.slane %v871, %v875
      %877 = vset.pattern.permute.xlu0 0
      %878 = vperm.xlu0 %877, %v876
      %v879 = vpop.permute.xlu0 %878
      %v881 = vmul.f32 %v856, %v879
      %v882 = vadd.f32 %v816, %v881
      %s883 = scalar_lea.vmem %s5, 34
      %v884 = vld [vmem:[%s883] sm:$0x1]
      %v886 = vlaneseq
      %v887 = vshrl.u32 %v886, 7
      %v888 = vsub.s32 0, %v887
      %v889 = vrot.slane %v884, %v888
      %890 = vset.pattern.permute.xlu0 0
      %891 = vperm.xlu0 %890, %v889
      %v892 = vpop.permute.xlu0 %891
      %v894 = vmul.f32 %v856, %v892
      %v895 = vadd.f32 %v833, %v894
      %s896 = scalar_lea.vmem %s5, 35
      %v897 = vld [vmem:[%s896] sm:$0x1]
      %v899 = vlaneseq
      %v900 = vshrl.u32 %v899, 7
      %v901 = vsub.s32 0, %v900
      %v902 = vrot.slane %v897, %v901
      %903 = vset.pattern.permute.xlu0 0
      %904 = vperm.xlu0 %903, %v902
      %v905 = vpop.permute.xlu0 %904
      %v907 = vmul.f32 %v856, %v905
      %v908 = vadd.f32 %v850, %v907
      %v909 = vld [vmem:[%s330] sm:$0xff]
      %vm910 = vcmask 130048
      %v912 = vsel %vm910, %v909, 0
      %914 = vmatprep.subr.mxu0 0.0
      %915 = vmatpush1.msra.mxu0 %v339
      %916 = vmatprep.subr.mxu0 0.0
      %917 = vmatpush1.msra.mxu0 %v340
      %918 = vmatprep.subr.mxu0 0.0
      %919 = vmatpush1.msra.mxu0 0.0
      %920 = vmatprep.subr.mxu0 0.0
      %921 = vmatpush1.msra.mxu0 0.0
      %922 = vmatprep.subr.mxu0 0.0
      %923 = vmatpush1.msra.mxu0 0.0
      %924 = vmatprep.subr.mxu0 0.0
      %925 = vmatpush1.msra.mxu0 0.0
      %926 = vmatprep.subr.mxu0 0.0
      %927 = vmatpush1.msra.mxu0 0.0
      %928 = vmatprep.subr.mxu0 0.0
      %929 = vmatpush1.msra.mxu0 0.0
      %930 = vmatprep.subr.mxu0 0.0
      %931 = vmatpush1.msra.mxu0 0.0
      %932 = vmatprep.subr.mxu0 0.0
      %933 = vmatpush1.msra.mxu0 0.0
      %934 = vmatprep.subr.mxu0 0.0
      %935 = vmatpush1.msra.mxu0 0.0
      %936 = vmatprep.subr.mxu0 0.0
      %937 = vmatpush1.msra.mxu0 0.0
      %938 = vmatprep.subr.mxu0 0.0
      %939 = vmatpush1.msra.mxu0 0.0
      %940 = vmatprep.subr.mxu0 0.0
      %941 = vmatpush1.msra.mxu0 0.0
      %942 = vmatprep.subr.mxu0 0.0
      %943 = vmatpush1.msra.mxu0 0.0
      %944 = vmatprep.subr.mxu0 0.0
      %945 = vmatpush1.msra.mxu0 0.0
      %946 = vmatprep.subr.mxu0 0.0
      %947 = vmatpush1.msra.mxu0 0.0
      %948 = vmatprep.subr.mxu0 0.0
      %949 = vmatpush1.msra.mxu0 0.0
      %950 = vmatprep.subr.mxu0 0.0
      %951 = vmatpush1.msra.mxu0 0.0
      %952 = vmatprep.subr.mxu0 0.0
      %953 = vmatpush1.msra.mxu0 0.0
      %954 = vmatprep.subr.mxu0 0.0
      %955 = vmatpush1.msra.mxu0 0.0
      %956 = vmatprep.subr.mxu0 0.0
      %957 = vmatpush1.msra.mxu0 0.0
      %958 = vmatprep.subr.mxu0 0.0
      %959 = vmatpush1.msra.mxu0 0.0
      %960 = vmatprep.subr.mxu0 0.0
      %961 = vmatpush1.msra.mxu0 0.0
      %962 = vmatprep.subr.mxu0 0.0
      %963 = vmatpush1.msra.mxu0 0.0
      %964 = vmatprep.subr.mxu0 0.0
      %965 = vmatpush1.msra.mxu0 0.0
      %966 = vmatprep.subr.mxu0 0.0
      %967 = vmatpush1.msra.mxu0 0.0
      %968 = vmatprep.subr.mxu0 0.0
      %969 = vmatpush1.msra.mxu0 0.0
      %970 = vmatprep.subr.mxu0 0.0
      %971 = vmatpush1.msra.mxu0 0.0
      %972 = vmatprep.subr.mxu0 0.0
      %973 = vmatpush1.msra.mxu0 0.0
      %974 = vmatprep.subr.mxu0 0.0
      %975 = vmatpush1.msra.mxu0 0.0
      %976 = vmatprep.subr.mxu0 0.0
      %977 = vmatpush1.msra.mxu0 0.0
      %978 = vmatprep.mubr.f32.mxu0 0.0
      %979 = vmatmul.mubr.f32.gmra.mrb[0].mxu0 %v912
      %v980 = vpop.f32.mrb[0].mxu0
      %v981 = vadd.f32 0.0, %v980
      %v982 = vpop.f32.mrb[0].mxu0
      %983 = vdwg.mxu0
      %v984 = vld [vmem:[%s3] sm:$0xff]
      %v985 = vld [vmem:[%s3 + $0x8] sm:$0xff]
      %v986 = vld [vmem:[%s4] sm:$0xff]
      %v987 = vld [vmem:[%s4 + $0x8] sm:$0xff]
      %v989 = vsel %vm910, %v869, 0
      %991 = vmatprep.subr.mxu0 0.0
      %992 = vmatpush1.msra.mxu0 %v986
      %993 = vmatprep.subr.mxu0 0.0
      %994 = vmatpush1.msra.mxu0 %v987
      %995 = vmatprep.subr.mxu0 0.0
      %996 = vmatpush1.msra.mxu0 0.0
      %997 = vmatprep.subr.mxu0 0.0
      %998 = vmatpush1.msra.mxu0 0.0
      %999 = vmatprep.subr.mxu0 0.0
      %1000 = vmatpush1.msra.mxu0 0.0
      %1001 = vmatprep.subr.mxu0 0.0
      %1002 = vmatpush1.msra.mxu0 0.0
      %1003 = vmatprep.subr.mxu0 0.0
      %1004 = vmatpush1.msra.mxu0 0.0
      %1005 = vmatprep.subr.mxu0 0.0
      %1006 = vmatpush1.msra.mxu0 0.0
      %1007 = vmatprep.subr.mxu0 0.0
      %1008 = vmatpush1.msra.mxu0 0.0
      %1009 = vmatprep.subr.mxu0 0.0
      %1010 = vmatpush1.msra.mxu0 0.0
      %1011 = vmatprep.subr.mxu0 0.0
      %1012 = vmatpush1.msra.mxu0 0.0
      %1013 = vmatprep.subr.mxu0 0.0
      %1014 = vmatpush1.msra.mxu0 0.0
      %1015 = vmatprep.subr.mxu0 0.0
      %1016 = vmatpush1.msra.mxu0 0.0
      %1017 = vmatprep.subr.mxu0 0.0
      %1018 = vmatpush1.msra.mxu0 0.0
      %1019 = vmatprep.subr.mxu0 0.0
      %1020 = vmatpush1.msra.mxu0 0.0
      %1021 = vmatprep.subr.mxu0 0.0
      %1022 = vmatpush1.msra.mxu0 0.0
      %1023 = vmatprep.subr.mxu0 0.0
      %1024 = vmatpush1.msra.mxu0 0.0
      %1025 = vmatprep.subr.mxu0 0.0
      %1026 = vmatpush1.msra.mxu0 0.0
      %1027 = vmatprep.subr.mxu0 0.0
      %1028 = vmatpush1.msra.mxu0 0.0
      %1029 = vmatprep.subr.mxu0 0.0
      %1030 = vmatpush1.msra.mxu0 0.0
      %1031 = vmatprep.subr.mxu0 0.0
      %1032 = vmatpush1.msra.mxu0 0.0
      %1033 = vmatprep.subr.mxu0 0.0
      %1034 = vmatpush1.msra.mxu0 0.0
      %1035 = vmatprep.subr.mxu0 0.0
      %1036 = vmatpush1.msra.mxu0 0.0
      %1037 = vmatprep.subr.mxu0 0.0
      %1038 = vmatpush1.msra.mxu0 0.0
      %1039 = vmatprep.subr.mxu0 0.0
      %1040 = vmatpush1.msra.mxu0 0.0
      %1041 = vmatprep.subr.mxu0 0.0
      %1042 = vmatpush1.msra.mxu0 0.0
      %1043 = vmatprep.subr.mxu0 0.0
      %1044 = vmatpush1.msra.mxu0 0.0
      %1045 = vmatprep.subr.mxu0 0.0
      %1046 = vmatpush1.msra.mxu0 0.0
      %1047 = vmatprep.subr.mxu0 0.0
      %1048 = vmatpush1.msra.mxu0 0.0
      %1049 = vmatprep.subr.mxu0 0.0
      %1050 = vmatpush1.msra.mxu0 0.0
      %1051 = vmatprep.subr.mxu0 0.0
      %1052 = vmatpush1.msra.mxu0 0.0
      %1053 = vmatprep.subr.mxu0 0.0
      %1054 = vmatpush1.msra.mxu0 0.0
      %1055 = vmatprep.mubr.f32.mxu0 0.0
      %1056 = vmatmul.mubr.f32.gmra.mrb[0].mxu0 %v989
      %v1057 = vpop.f32.mrb[0].mxu0
      %v1058 = vadd.f32 0.0, %v1057
      %v1059 = vpop.f32.mrb[0].mxu0
      %1060 = vdwg.mxu0
      %v1062 = vsel %vm910, %v981, 0
      %1064 = vmatprep.subr.mxu0 0.0
      %1065 = vmatpush1.msra.mxu0 %v984
      %1066 = vmatprep.subr.mxu0 0.0
      %1067 = vmatpush1.msra.mxu0 %v985
      %1068 = vmatprep.subr.mxu0 0.0
      %1069 = vmatpush1.msra.mxu0 0.0
      %1070 = vmatprep.subr.mxu0 0.0
      %1071 = vmatpush1.msra.mxu0 0.0
      %1072 = vmatprep.subr.mxu0 0.0
      %1073 = vmatpush1.msra.mxu0 0.0
      %1074 = vmatprep.subr.mxu0 0.0
      %1075 = vmatpush1.msra.mxu0 0.0
      %1076 = vmatprep.subr.mxu0 0.0
      %1077 = vmatpush1.msra.mxu0 0.0
      %1078 = vmatprep.subr.mxu0 0.0
      %1079 = vmatpush1.msra.mxu0 0.0
      %1080 = vmatprep.subr.mxu0 0.0
      %1081 = vmatpush1.msra.mxu0 0.0
      %1082 = vmatprep.subr.mxu0 0.0
      %1083 = vmatpush1.msra.mxu0 0.0
      %1084 = vmatprep.subr.mxu0 0.0
      %1085 = vmatpush1.msra.mxu0 0.0
      %1086 = vmatprep.subr.mxu0 0.0
      %1087 = vmatpush1.msra.mxu0 0.0
      %1088 = vmatprep.subr.mxu0 0.0
      %1089 = vmatpush1.msra.mxu0 0.0
      %1090 = vmatprep.subr.mxu0 0.0
      %1091 = vmatpush1.msra.mxu0 0.0
      %1092 = vmatprep.subr.mxu0 0.0
      %1093 = vmatpush1.msra.mxu0 0.0
      %1094 = vmatprep.subr.mxu0 0.0
      %1095 = vmatpush1.msra.mxu0 0.0
      %1096 = vmatprep.subr.mxu0 0.0
      %1097 = vmatpush1.msra.mxu0 0.0
      %1098 = vmatprep.subr.mxu0 0.0
      %1099 = vmatpush1.msra.mxu0 0.0
      %1100 = vmatprep.subr.mxu0 0.0
      %1101 = vmatpush1.msra.mxu0 0.0
      %1102 = vmatprep.subr.mxu0 0.0
      %1103 = vmatpush1.msra.mxu0 0.0
      %1104 = vmatprep.subr.mxu0 0.0
      %1105 = vmatpush1.msra.mxu0 0.0
      %1106 = vmatprep.subr.mxu0 0.0
      %1107 = vmatpush1.msra.mxu0 0.0
      %1108 = vmatprep.subr.mxu0 0.0
      %1109 = vmatpush1.msra.mxu0 0.0
      %1110 = vmatprep.subr.mxu0 0.0
      %1111 = vmatpush1.msra.mxu0 0.0
      %1112 = vmatprep.subr.mxu0 0.0
      %1113 = vmatpush1.msra.mxu0 0.0
      %1114 = vmatprep.subr.mxu0 0.0
      %1115 = vmatpush1.msra.mxu0 0.0
      %1116 = vmatprep.subr.mxu0 0.0
      %1117 = vmatpush1.msra.mxu0 0.0
      %1118 = vmatprep.subr.mxu0 0.0
      %1119 = vmatpush1.msra.mxu0 0.0
      %1120 = vmatprep.subr.mxu0 0.0
      %1121 = vmatpush1.msra.mxu0 0.0
      %1122 = vmatprep.subr.mxu0 0.0
      %1123 = vmatpush1.msra.mxu0 0.0
      %1124 = vmatprep.subr.mxu0 0.0
      %1125 = vmatpush1.msra.mxu0 0.0
      %1126 = vmatprep.subr.mxu0 0.0
      %1127 = vmatpush1.msra.mxu0 0.0
      %1128 = vmatprep.mubr.f32.mxu0 0.0
      %1129 = vmatmul.mubr.f32.gmra.mrb[0].mxu0 %v1062
      %v1130 = vpop.f32.mrb[0].mxu0
      %v1131 = vadd.f32 %v1058, %v1130
      %v1132 = vpop.f32.mrb[0].mxu0
      %1133 = vdwg.mxu0
      %s1134 = scalar_lea.vmem %s4, 16
      %v1135 = vld [vmem:[%s1134] sm:$0xff]
      %v1136 = vld [vmem:[%s1134 + $0x8] sm:$0xff]
      %v1138 = vsel %vm910, %v882, 0
      %1140 = vmatprep.subr.mxu0 0.0
      %1141 = vmatpush1.msra.mxu0 %v1135
      %1142 = vmatprep.subr.mxu0 0.0
      %1143 = vmatpush1.msra.mxu0 %v1136
      %1144 = vmatprep.subr.mxu0 0.0
      %1145 = vmatpush1.msra.mxu0 0.0
      %1146 = vmatprep.subr.mxu0 0.0
      %1147 = vmatpush1.msra.mxu0 0.0
      %1148 = vmatprep.subr.mxu0 0.0
      %1149 = vmatpush1.msra.mxu0 0.0
      %1150 = vmatprep.subr.mxu0 0.0
      %1151 = vmatpush1.msra.mxu0 0.0
      %1152 = vmatprep.subr.mxu0 0.0
      %1153 = vmatpush1.msra.mxu0 0.0
      %1154 = vmatprep.subr.mxu0 0.0
      %1155 = vmatpush1.msra.mxu0 0.0
      %1156 = vmatprep.subr.mxu0 0.0
      %1157 = vmatpush1.msra.mxu0 0.0
      %1158 = vmatprep.subr.mxu0 0.0
      %1159 = vmatpush1.msra.mxu0 0.0
      %1160 = vmatprep.subr.mxu0 0.0
      %1161 = vmatpush1.msra.mxu0 0.0
      %1162 = vmatprep.subr.mxu0 0.0
      %1163 = vmatpush1.msra.mxu0 0.0
      %1164 = vmatprep.subr.mxu0 0.0
      %1165 = vmatpush1.msra.mxu0 0.0
      %1166 = vmatprep.subr.mxu0 0.0
      %1167 = vmatpush1.msra.mxu0 0.0
      %1168 = vmatprep.subr.mxu0 0.0
      %1169 = vmatpush1.msra.mxu0 0.0
      %1170 = vmatprep.subr.mxu0 0.0
      %1171 = vmatpush1.msra.mxu0 0.0
      %1172 = vmatprep.subr.mxu0 0.0
      %1173 = vmatpush1.msra.mxu0 0.0
      %1174 = vmatprep.subr.mxu0 0.0
      %1175 = vmatpush1.msra.mxu0 0.0
      %1176 = vmatprep.subr.mxu0 0.0
      %1177 = vmatpush1.msra.mxu0 0.0
      %1178 = vmatprep.subr.mxu0 0.0
      %1179 = vmatpush1.msra.mxu0 0.0
      %1180 = vmatprep.subr.mxu0 0.0
      %1181 = vmatpush1.msra.mxu0 0.0
      %1182 = vmatprep.subr.mxu0 0.0
      %1183 = vmatpush1.msra.mxu0 0.0
      %1184 = vmatprep.subr.mxu0 0.0
      %1185 = vmatpush1.msra.mxu0 0.0
      %1186 = vmatprep.subr.mxu0 0.0
      %1187 = vmatpush1.msra.mxu0 0.0
      %1188 = vmatprep.subr.mxu0 0.0
      %1189 = vmatpush1.msra.mxu0 0.0
      %1190 = vmatprep.subr.mxu0 0.0
      %1191 = vmatpush1.msra.mxu0 0.0
      %1192 = vmatprep.subr.mxu0 0.0
      %1193 = vmatpush1.msra.mxu0 0.0
      %1194 = vmatprep.subr.mxu0 0.0
      %1195 = vmatpush1.msra.mxu0 0.0
      %1196 = vmatprep.subr.mxu0 0.0
      %1197 = vmatpush1.msra.mxu0 0.0
      %1198 = vmatprep.subr.mxu0 0.0
      %1199 = vmatpush1.msra.mxu0 0.0
      %1200 = vmatprep.subr.mxu0 0.0
      %1201 = vmatpush1.msra.mxu0 0.0
      %1202 = vmatprep.subr.mxu0 0.0
      %1203 = vmatpush1.msra.mxu0 0.0
      %1204 = vmatprep.mubr.f32.mxu0 0.0
      %1205 = vmatmul.mubr.f32.gmra.mrb[0].mxu0 %v1138
      %v1206 = vpop.f32.mrb[0].mxu0
      %v1207 = vadd.f32 0.0, %v1206
      %v1208 = vpop.f32.mrb[0].mxu0
      %1209 = vdwg.mxu0
      %v1210 = vadd.f32 %v1131, %v1207
      %v1211 = vld [vmem:[%s6] sm:$0x1]
      %v1213 = vlaneseq
      %v1214 = vshrl.u32 %v1213, 7
      %v1215 = vsub.s32 0, %v1214
      %v1216 = vrot.slane %v1211, %v1215
      %v1218 = vadd.f32 %v1210, %v1216
      %s1219 = scalar_lea.vmem %s330, 8
      %v1220 = vld [vmem:[%s1219] sm:$0xff]
      %v1222 = vsel %vm910, %v1220, 0
      %1224 = vmatprep.subr.mxu0 0.0
      %1225 = vmatpush1.msra.mxu0 %v339
      %1226 = vmatprep.subr.mxu0 0.0
      %1227 = vmatpush1.msra.mxu0 %v340
      %1228 = vmatprep.subr.mxu0 0.0
      %1229 = vmatpush1.msra.mxu0 0.0
      %1230 = vmatprep.subr.mxu0 0.0
      %1231 = vmatpush1.msra.mxu0 0.0
      %1232 = vmatprep.subr.mxu0 0.0
      %1233 = vmatpush1.msra.mxu0 0.0
      %1234 = vmatprep.subr.mxu0 0.0
      %1235 = vmatpush1.msra.mxu0 0.0
      %1236 = vmatprep.subr.mxu0 0.0
      %1237 = vmatpush1.msra.mxu0 0.0
      %1238 = vmatprep.subr.mxu0 0.0
      %1239 = vmatpush1.msra.mxu0 0.0
      %1240 = vmatprep.subr.mxu0 0.0
      %1241 = vmatpush1.msra.mxu0 0.0
      %1242 = vmatprep.subr.mxu0 0.0
      %1243 = vmatpush1.msra.mxu0 0.0
      %1244 = vmatprep.subr.mxu0 0.0
      %1245 = vmatpush1.msra.mxu0 0.0
      %1246 = vmatprep.subr.mxu0 0.0
      %1247 = vmatpush1.msra.mxu0 0.0
      %1248 = vmatprep.subr.mxu0 0.0
      %1249 = vmatpush1.msra.mxu0 0.0
      %1250 = vmatprep.subr.mxu0 0.0
      %1251 = vmatpush1.msra.mxu0 0.0
      %1252 = vmatprep.subr.mxu0 0.0
      %1253 = vmatpush1.msra.mxu0 0.0
      %1254 = vmatprep.subr.mxu0 0.0
      %1255 = vmatpush1.msra.mxu0 0.0
      %1256 = vmatprep.subr.mxu0 0.0
      %1257 = vmatpush1.msra.mxu0 0.0
      %1258 = vmatprep.subr.mxu0 0.0
      %1259 = vmatpush1.msra.mxu0 0.0
      %1260 = vmatprep.subr.mxu0 0.0
      %1261 = vmatpush1.msra.mxu0 0.0
      %1262 = vmatprep.subr.mxu0 0.0
      %1263 = vmatpush1.msra.mxu0 0.0
      %1264 = vmatprep.subr.mxu0 0.0
      %1265 = vmatpush1.msra.mxu0 0.0
      %1266 = vmatprep.subr.mxu0 0.0
      %1267 = vmatpush1.msra.mxu0 0.0
      %1268 = vmatprep.subr.mxu0 0.0
      %1269 = vmatpush1.msra.mxu0 0.0
      %1270 = vmatprep.subr.mxu0 0.0
      %1271 = vmatpush1.msra.mxu0 0.0
      %1272 = vmatprep.subr.mxu0 0.0
      %1273 = vmatpush1.msra.mxu0 0.0
      %1274 = vmatprep.subr.mxu0 0.0
      %1275 = vmatpush1.msra.mxu0 0.0
      %1276 = vmatprep.subr.mxu0 0.0
      %1277 = vmatpush1.msra.mxu0 0.0
      %1278 = vmatprep.subr.mxu0 0.0
      %1279 = vmatpush1.msra.mxu0 0.0
      %1280 = vmatprep.subr.mxu0 0.0
      %1281 = vmatpush1.msra.mxu0 0.0
      %1282 = vmatprep.subr.mxu0 0.0
      %1283 = vmatpush1.msra.mxu0 0.0
      %1284 = vmatprep.subr.mxu0 0.0
      %1285 = vmatpush1.msra.mxu0 0.0
      %1286 = vmatprep.subr.mxu0 0.0
      %1287 = vmatpush1.msra.mxu0 0.0
      %1288 = vmatprep.mubr.f32.mxu0 0.0
      %1289 = vmatmul.mubr.f32.gmra.mrb[0].mxu0 %v1222
      %v1290 = vpop.f32.mrb[0].mxu0
      %v1291 = vadd.f32 0.0, %v1290
      %v1292 = vpop.f32.mrb[0].mxu0
      %1293 = vdwg.mxu0
      %v1295 = vsel %vm910, %v895, 0
      %1297 = vmatprep.subr.mxu0 0.0
      %1298 = vmatpush1.msra.mxu0 %v986
      %1299 = vmatprep.subr.mxu0 0.0
      %1300 = vmatpush1.msra.mxu0 %v987
      %1301 = vmatprep.subr.mxu0 0.0
      %1302 = vmatpush1.msra.mxu0 0.0
      %1303 = vmatprep.subr.mxu0 0.0
      %1304 = vmatpush1.msra.mxu0 0.0
      %1305 = vmatprep.subr.mxu0 0.0
      %1306 = vmatpush1.msra.mxu0 0.0
      %1307 = vmatprep.subr.mxu0 0.0
      %1308 = vmatpush1.msra.mxu0 0.0
      %1309 = vmatprep.subr.mxu0 0.0
      %1310 = vmatpush1.msra.mxu0 0.0
      %1311 = vmatprep.subr.mxu0 0.0
      %1312 = vmatpush1.msra.mxu0 0.0
      %1313 = vmatprep.subr.mxu0 0.0
      %1314 = vmatpush1.msra.mxu0 0.0
      %1315 = vmatprep.subr.mxu0 0.0
      %1316 = vmatpush1.msra.mxu0 0.0
      %1317 = vmatprep.subr.mxu0 0.0
      %1318 = vmatpush1.msra.mxu0 0.0
      %1319 = vmatprep.subr.mxu0 0.0
      %1320 = vmatpush1.msra.mxu0 0.0
      %1321 = vmatprep.subr.mxu0 0.0
      %1322 = vmatpush1.msra.mxu0 0.0
      %1323 = vmatprep.subr.mxu0 0.0
      %1324 = vmatpush1.msra.mxu0 0.0
      %1325 = vmatprep.subr.mxu0 0.0
      %1326 = vmatpush1.msra.mxu0 0.0
      %1327 = vmatprep.subr.mxu0 0.0
      %1328 = vmatpush1.msra.mxu0 0.0
      %1329 = vmatprep.subr.mxu0 0.0
      %1330 = vmatpush1.msra.mxu0 0.0
      %1331 = vmatprep.subr.mxu0 0.0
      %1332 = vmatpush1.msra.mxu0 0.0
      %1333 = vmatprep.subr.mxu0 0.0
      %1334 = vmatpush1.msra.mxu0 0.0
      %1335 = vmatprep.subr.mxu0 0.0
      %1336 = vmatpush1.msra.mxu0 0.0
      %1337 = vmatprep.subr.mxu0 0.0
      %1338 = vmatpush1.msra.mxu0 0.0
      %1339 = vmatprep.subr.mxu0 0.0
      %1340 = vmatpush1.msra.mxu0 0.0
      %1341 = vmatprep.subr.mxu0 0.0
      %1342 = vmatpush1.msra.mxu0 0.0
      %1343 = vmatprep.subr.mxu0 0.0
      %1344 = vmatpush1.msra.mxu0 0.0
      %1345 = vmatprep.subr.mxu0 0.0
      %1346 = vmatpush1.msra.mxu0 0.0
      %1347 = vmatprep.subr.mxu0 0.0
      %1348 = vmatpush1.msra.mxu0 0.0
      %1349 = vmatprep.subr.mxu0 0.0
      %1350 = vmatpush1.msra.mxu0 0.0
      %1351 = vmatprep.subr.mxu0 0.0
      %1352 = vmatpush1.msra.mxu0 0.0
      %1353 = vmatprep.subr.mxu0 0.0
      %1354 = vmatpush1.msra.mxu0 0.0
      %1355 = vmatprep.subr.mxu0 0.0
      %1356 = vmatpush1.msra.mxu0 0.0
      %1357 = vmatprep.subr.mxu0 0.0
      %1358 = vmatpush1.msra.mxu0 0.0
      %1359 = vmatprep.subr.mxu0 0.0
      %1360 = vmatpush1.msra.mxu0 0.0
      %1361 = vmatprep.mubr.f32.mxu0 0.0
      %1362 = vmatmul.mubr.f32.gmra.mrb[0].mxu0 %v1295
      %v1363 = vpop.f32.mrb[0].mxu0
      %v1364 = vadd.f32 0.0, %v1363
      %v1365 = vpop.f32.mrb[0].mxu0
      %1366 = vdwg.mxu0
      %v1368 = vsel %vm910, %v1291, 0
      %1370 = vmatprep.subr.mxu0 0.0
      %1371 = vmatpush1.msra.mxu0 %v984
      %1372 = vmatprep.subr.mxu0 0.0
      %1373 = vmatpush1.msra.mxu0 %v985
      %1374 = vmatprep.subr.mxu0 0.0
      %1375 = vmatpush1.msra.mxu0 0.0
      %1376 = vmatprep.subr.mxu0 0.0
      %1377 = vmatpush1.msra.mxu0 0.0
      %1378 = vmatprep.subr.mxu0 0.0
      %1379 = vmatpush1.msra.mxu0 0.0
      %1380 = vmatprep.subr.mxu0 0.0
      %1381 = vmatpush1.msra.mxu0 0.0
      %1382 = vmatprep.subr.mxu0 0.0
      %1383 = vmatpush1.msra.mxu0 0.0
      %1384 = vmatprep.subr.mxu0 0.0
      %1385 = vmatpush1.msra.mxu0 0.0
      %1386 = vmatprep.subr.mxu0 0.0
      %1387 = vmatpush1.msra.mxu0 0.0
      %1388 = vmatprep.subr.mxu0 0.0
      %1389 = vmatpush1.msra.mxu0 0.0
      %1390 = vmatprep.subr.mxu0 0.0
      %1391 = vmatpush1.msra.mxu0 0.0
      %1392 = vmatprep.subr.mxu0 0.0
      %1393 = vmatpush1.msra.mxu0 0.0
      %1394 = vmatprep.subr.mxu0 0.0
      %1395 = vmatpush1.msra.mxu0 0.0
      %1396 = vmatprep.subr.mxu0 0.0
      %1397 = vmatpush1.msra.mxu0 0.0
      %1398 = vmatprep.subr.mxu0 0.0
      %1399 = vmatpush1.msra.mxu0 0.0
      %1400 = vmatprep.subr.mxu0 0.0
      %1401 = vmatpush1.msra.mxu0 0.0
      %1402 = vmatprep.subr.mxu0 0.0
      %1403 = vmatpush1.msra.mxu0 0.0
      %1404 = vmatprep.subr.mxu0 0.0
      %1405 = vmatpush1.msra.mxu0 0.0
      %1406 = vmatprep.subr.mxu0 0.0
      %1407 = vmatpush1.msra.mxu0 0.0
      %1408 = vmatprep.subr.mxu0 0.0
      %1409 = vmatpush1.msra.mxu0 0.0
      %1410 = vmatprep.subr.mxu0 0.0
      %1411 = vmatpush1.msra.mxu0 0.0
      %1412 = vmatprep.subr.mxu0 0.0
      %1413 = vmatpush1.msra.mxu0 0.0
      %1414 = vmatprep.subr.mxu0 0.0
      %1415 = vmatpush1.msra.mxu0 0.0
      %1416 = vmatprep.subr.mxu0 0.0
      %1417 = vmatpush1.msra.mxu0 0.0
      %1418 = vmatprep.subr.mxu0 0.0
      %1419 = vmatpush1.msra.mxu0 0.0
      %1420 = vmatprep.subr.mxu0 0.0
      %1421 = vmatpush1.msra.mxu0 0.0
      %1422 = vmatprep.subr.mxu0 0.0
      %1423 = vmatpush1.msra.mxu0 0.0
      %1424 = vmatprep.subr.mxu0 0.0
      %1425 = vmatpush1.msra.mxu0 0.0
      %1426 = vmatprep.subr.mxu0 0.0
      %1427 = vmatpush1.msra.mxu0 0.0
      %1428 = vmatprep.subr.mxu0 0.0
      %1429 = vmatpush1.msra.mxu0 0.0
      %1430 = vmatprep.subr.mxu0 0.0
      %1431 = vmatpush1.msra.mxu0 0.0
      %1432 = vmatprep.subr.mxu0 0.0
      %1433 = vmatpush1.msra.mxu0 0.0
      %1434 = vmatprep.mubr.f32.mxu0 0.0
      %1435 = vmatmul.mubr.f32.gmra.mrb[0].mxu0 %v1368
      %v1436 = vpop.f32.mrb[0].mxu0
      %v1437 = vadd.f32 %v1364, %v1436
      %v1438 = vpop.f32.mrb[0].mxu0
      %1439 = vdwg.mxu0
      %v1441 = vsel %vm910, %v908, 0
      %1443 = vmatprep.subr.mxu0 0.0
      %1444 = vmatpush1.msra.mxu0 %v1135
      %1445 = vmatprep.subr.mxu0 0.0
      %1446 = vmatpush1.msra.mxu0 %v1136
      %1447 = vmatprep.subr.mxu0 0.0
      %1448 = vmatpush1.msra.mxu0 0.0
      %1449 = vmatprep.subr.mxu0 0.0
      %1450 = vmatpush1.msra.mxu0 0.0
      %1451 = vmatprep.subr.mxu0 0.0
      %1452 = vmatpush1.msra.mxu0 0.0
      %1453 = vmatprep.subr.mxu0 0.0
      %1454 = vmatpush1.msra.mxu0 0.0
      %1455 = vmatprep.subr.mxu0 0.0
      %1456 = vmatpush1.msra.mxu0 0.0
      %1457 = vmatprep.subr.mxu0 0.0
      %1458 = vmatpush1.msra.mxu0 0.0
      %1459 = vmatprep.subr.mxu0 0.0
      %1460 = vmatpush1.msra.mxu0 0.0
      %1461 = vmatprep.subr.mxu0 0.0
      %1462 = vmatpush1.msra.mxu0 0.0
      %1463 = vmatprep.subr.mxu0 0.0
      %1464 = vmatpush1.msra.mxu0 0.0
      %1465 = vmatprep.subr.mxu0 0.0
      %1466 = vmatpush1.msra.mxu0 0.0
      %1467 = vmatprep.subr.mxu0 0.0
      %1468 = vmatpush1.msra.mxu0 0.0
      %1469 = vmatprep.subr.mxu0 0.0
      %1470 = vmatpush1.msra.mxu0 0.0
      %1471 = vmatprep.subr.mxu0 0.0
      %1472 = vmatpush1.msra.mxu0 0.0
      %1473 = vmatprep.subr.mxu0 0.0
      %1474 = vmatpush1.msra.mxu0 0.0
      %1475 = vmatprep.subr.mxu0 0.0
      %1476 = vmatpush1.msra.mxu0 0.0
      %1477 = vmatprep.subr.mxu0 0.0
      %1478 = vmatpush1.msra.mxu0 0.0
      %1479 = vmatprep.subr.mxu0 0.0
      %1480 = vmatpush1.msra.mxu0 0.0
      %1481 = vmatprep.subr.mxu0 0.0
      %1482 = vmatpush1.msra.mxu0 0.0
      %1483 = vmatprep.subr.mxu0 0.0
      %1484 = vmatpush1.msra.mxu0 0.0
      %1485 = vmatprep.subr.mxu0 0.0
      %1486 = vmatpush1.msra.mxu0 0.0
      %1487 = vmatprep.subr.mxu0 0.0
      %1488 = vmatpush1.msra.mxu0 0.0
      %1489 = vmatprep.subr.mxu0 0.0
      %1490 = vmatpush1.msra.mxu0 0.0
      %1491 = vmatprep.subr.mxu0 0.0
      %1492 = vmatpush1.msra.mxu0 0.0
      %1493 = vmatprep.subr.mxu0 0.0
      %1494 = vmatpush1.msra.mxu0 0.0
      %1495 = vmatprep.subr.mxu0 0.0
      %1496 = vmatpush1.msra.mxu0 0.0
      %1497 = vmatprep.subr.mxu0 0.0
      %1498 = vmatpush1.msra.mxu0 0.0
      %1499 = vmatprep.subr.mxu0 0.0
      %1500 = vmatpush1.msra.mxu0 0.0
      %1501 = vmatprep.subr.mxu0 0.0
      %1502 = vmatpush1.msra.mxu0 0.0
      %1503 = vmatprep.subr.mxu0 0.0
      %1504 = vmatpush1.msra.mxu0 0.0
      %1505 = vmatprep.subr.mxu0 0.0
      %1506 = vmatpush1.msra.mxu0 0.0
      %1507 = vmatprep.mubr.f32.mxu0 0.0
      %1508 = vmatmul.mubr.f32.gmra.mrb[0].mxu0 %v1441
      %v1509 = vpop.f32.mrb[0].mxu0
      %v1510 = vadd.f32 0.0, %v1509
      %v1511 = vpop.f32.mrb[0].mxu0
      %1512 = vdwg.mxu0
      %v1513 = vadd.f32 %v1437, %v1510
      %s1514 = scalar_lea.vmem %s6, 1
      %v1515 = vld [vmem:[%s1514] sm:$0x1]
      %v1517 = vlaneseq
      %v1518 = vshrl.u32 %v1517, 7
      %v1519 = vsub.s32 0, %v1518
      %v1520 = vrot.slane %v1515, %v1519
      %v1522 = vadd.f32 %v1513, %v1520
      %1524 = vrot.lane.b32.xlu0 %v1522, 32
      %v1525 = vpop.permute.xlu0 %1524
      %vm1527 = vcmask 261120
      %v1528 = vsel %vm1527, %v1218, %v1525
      %vm1529 = vcmask 523264
      %1530 = vst.msk [vmem:[%s338] sm:$0xff] %vm1529, %v1528
      %p1531 = scmp.lt.s32.totalorder %s22, 1
      %s1532 = scalar_select %p1531, %s22, 1
      %p1533 = scmp.lt.s32.totalorder %s23, 1
      %s1534 = scalar_select %p1533, %s23, 1
      %s1535 = smul.addr %s1532, 2
      %s1536 = sadd.s32 %s1534, %s1535
      %s1537 = smul.addr %s1536, 8
      %s1538 = scalar_lea.vmem %s7, %s1537
      // Predicated region
      $region49: #{dsmnet_forward.1} parent=47 // pred_check
        %p1539 = pneg %p212
      $region50: #{dsmnet_forward.1} parent=47 // pred_check_branch
        %1541 = sbr.rel (%p1539) target = $region52
      $region51: #{dsmnet_forward.1} parent=47 // pred_region
        _
      $region52: #{dsmnet_forward.1} parent=47 // pred_fallthru
        _
    $region48: #{dsmnet_forward.1} parent=5 // pred_fallthru
      _
    %p1542 = scmp.le.s32.totalorder 2, %s13
    // Predicated region
    $region53: #{dsmnet_forward.1} parent=5 // pred_check
      %p1543 = pneg %p1542
    $region54: #{dsmnet_forward.1} parent=5 // pred_check_branch
      %1545 = sbr.rel (%p1543) target = $region56
    $region55: #{dsmnet_forward.1} parent=5 // pred_region
      %s1546 = ssub.s32 %s13, 2
      // Predicated region
      $region57: #{dsmnet_forward.1} parent=55 // pred_check
        %p1547 = pneg %p218
      $region58: #{dsmnet_forward.1} parent=55 // pred_check_branch
        %1549 = sbr.rel (%p1547) target = $region60
      $region59: #{dsmnet_forward.1} parent=55 // pred_region
        %p1550 = scmp.lt.s32.totalorder %s24, 1
        %s1551 = scalar_select %p1550, %s24, 1
        %p1552 = scmp.lt.s32.totalorder %s25, 1
        %s1553 = scalar_select %p1552, %s25, 1
        %s1554 = smul.addr %s1551, 2
        %s1555 = sadd.s32 %s1553, %s1554
        %s1556 = smul.addr %s1555, 8
        %s1557 = scalar_lea.vmem %s7, %s1556
      $region60: #{dsmnet_forward.1} parent=55 // pred_fallthru
        _
    $region56: #{dsmnet_forward.1} parent=5 // pred_fallthru
      _
  $region6: #{dsmnet_forward.1} parent=0 // loop_footer
    %s17 = sadd.s32 1, %s13
  $region7: #{dsmnet_forward.1} parent=0 // loop_footer_branch
    %12 = sbr.rel target = $region3
  $region8: #{dsmnet_forward.1} parent=0 // loop_exit
    _

</llo_original>
